<compile_context>
chip_gen: v7x
topology: tpu7x:2x2x1
jax: 0.10.0
libtpu: 0.0.40
codegen_flags: <defaults>
</compile_context>

<pallas_src>
import functools
import math

import jax
import jax.numpy as jnp
from jax.experimental import pallas as pl
from jax.experimental.pallas import tpu as pltpu


# --------------------------------------------------------------------------- #
# Fused bidirectional recurrence kernel (one layer, both directions)
# --------------------------------------------------------------------------- #
def _bilstm_recurrence_kernel(
    gx_f_ref,   # (L, N, 4H) f32 : precomputed x@W_ih^T + b  (forward dir)
    gx_b_ref,   # (L, N, 4H) f32 : precomputed x@W_ih^T + b  (backward dir)
    whh_f_ref,  # (H, 4H)   bf16 : W_hh^T (forward)
    whh_b_ref,  # (H, 4H)   bf16 : W_hh^T (backward)
    out_f_ref,  # (L, N, H)  f32 : forward hidden states
    out_b_ref,  # (L, N, H)  f32 : backward hidden states
    h_f_sc, c_f_sc, h_b_sc, c_b_sc,   # (N, H) f32 VMEM state scratch
    *, seq_len, hidden,
):
    L, H = seq_len, hidden

    # State lives in VMEM for the whole sequence (single kernel invocation).
    h_f_sc[...] = jnp.zeros_like(h_f_sc)
    c_f_sc[...] = jnp.zeros_like(c_f_sc)
    h_b_sc[...] = jnp.zeros_like(h_b_sc)
    c_b_sc[...] = jnp.zeros_like(c_b_sc)

    # Loop-invariant recurrent weights, loaded once (bf16 for MXU throughput).
    whh_f = whh_f_ref[...]
    whh_b = whh_b_ref[...]

    def lstm_cell(gates, c_prev):
        # Gate order matches PyTorch: i, f, g, o. Elementwise math stays f32.
        i_g = jax.nn.sigmoid(gates[:, 0 * H:1 * H])
        f_g = jax.nn.sigmoid(gates[:, 1 * H:2 * H])
        g_g = jnp.tanh(gates[:, 2 * H:3 * H])
        o_g = jax.nn.sigmoid(gates[:, 3 * H:4 * H])
        c_new = f_g * c_prev + i_g * g_g
        h_new = o_g * jnp.tanh(c_new)
        return h_new, c_new

    def step(t, _):
        tb = L - 1 - t
        # Two independent recurrences per step -> overlapping MXU/EUP chains.
        gates_f = gx_f_ref[t] + jnp.dot(
            h_f_sc[...].astype(jnp.bfloat16), whh_f,
            preferred_element_type=jnp.float32)
        gates_b = gx_b_ref[tb] + jnp.dot(
            h_b_sc[...].astype(jnp.bfloat16), whh_b,
            preferred_element_type=jnp.float32)

        h_f, c_f = lstm_cell(gates_f, c_f_sc[...])
        h_b, c_b = lstm_cell(gates_b, c_b_sc[...])

        h_f_sc[...] = h_f
        c_f_sc[...] = c_f
        h_b_sc[...] = h_b
        c_b_sc[...] = c_b

        # Stores land in the VMEM-resident output blocks; the HBM writeback
        # happens once at the end of the kernel.
        out_f_ref[t] = h_f.astype(out_f_ref.dtype)
        out_b_ref[tb] = h_b.astype(out_b_ref.dtype)
        return None

    jax.lax.fori_loop(0, L, step, None, unroll=True)


def bilstm_layer_recurrence(gx_f, gx_b, whh_f_t, whh_b_t):
    """gx_*: (L, N, 4H) f32 precomputed input gates; whh_*_t: (H, 4H) bf16."""
    L, N, H4 = gx_f.shape
    H = H4 // 4
    kern = functools.partial(_bilstm_recurrence_kernel, seq_len=L, hidden=H)

    return pl.pallas_call(
        kern,
        out_shape=(
            jax.ShapeDtypeStruct((L, N, H), jnp.float32),
            jax.ShapeDtypeStruct((L, N, H), jnp.float32),
        ),
        grid_spec=pltpu.PrefetchScalarGridSpec(
            num_scalar_prefetch=0,
            grid=(1,),  # single invocation: whole sequence resident in VMEM
            in_specs=[
                pl.BlockSpec((L, N, H4), lambda i: (0, 0, 0)),
                pl.BlockSpec((L, N, H4), lambda i: (0, 0, 0)),
                pl.BlockSpec((H, H4), lambda i: (0, 0)),
                pl.BlockSpec((H, H4), lambda i: (0, 0)),
            ],
            out_specs=[
                pl.BlockSpec((L, N, H), lambda i: (0, 0, 0)),
                pl.BlockSpec((L, N, H), lambda i: (0, 0, 0)),
            ],
            scratch_shapes=[
                pltpu.VMEM((N, H), jnp.float32),  # h fwd
                pltpu.VMEM((N, H), jnp.float32),  # c fwd
                pltpu.VMEM((N, H), jnp.float32),  # h bwd
                pltpu.VMEM((N, H), jnp.float32),  # c bwd
            ],
        ),
        compiler_params=pltpu.CompilerParams(
            dimension_semantics=("arbitrary",),
        ),
    )(gx_f, gx_b, whh_f_t, whh_b_t)


# --------------------------------------------------------------------------- #
# Hoisted input projection (time-independent): one big batched matmul.
# `parts` are the chunks whose concatenation along the feature axis is the layer
# input; consuming them separately avoids materializing the inter-layer concat.
# --------------------------------------------------------------------------- #
def _input_projection(parts, w_ih, b_ih, b_hh):
    gx = (b_ih + b_hh).astype(jnp.float32)          # (4H,)
    off = 0
    for p in parts:                                 # p: (L, N, d)
        d = p.shape[-1]
        w_t = jnp.asarray(w_ih[:, off:off + d].T, jnp.bfloat16)   # (d, 4H)
        gx = gx + jnp.einsum(
            "lnd,dg->lng", p.astype(jnp.bfloat16), w_t,
            preferred_element_type=jnp.float32)
        off += d
    return gx                                        # (L, N, 4H) f32


# --------------------------------------------------------------------------- #
# Parameters (same shapes / init scheme as nn.LSTM)
# --------------------------------------------------------------------------- #
def init_bilstm_params(key, input_dim, hidden_dim, num_layers):
    k = 1.0 / math.sqrt(hidden_dim)
    params = []
    for layer in range(num_layers):
        d_in = input_dim if layer == 0 else 2 * hidden_dim
        layer_p = {}
        for dname in ("fwd", "bwd"):
            key, k1, k2, k3, k4 = jax.random.split(key, 5)
            layer_p[dname] = (
                jax.random.uniform(k1, (4 * hidden_dim, d_in), jnp.float32, -k, k),
                jax.random.uniform(k2, (4 * hidden_dim, hidden_dim), jnp.float32, -k, k),
                jax.random.uniform(k3, (4 * hidden_dim,), jnp.float32, -k, k),
                jax.random.uniform(k4, (4 * hidden_dim,), jnp.float32, -k, k),
            )
        params.append(layer_p)
    return params


def time_series_bilstm(x, params):
    """x: [N, L, D] -> out: [N, L, 2*hidden_dim] (matches `return out` of the module)."""
    parts = [jnp.transpose(x, (1, 0, 2))]            # time-major [L, N, D], once
    for layer_p in params:
        w_ih_f, w_hh_f, b_ih_f, b_hh_f = layer_p["fwd"]
        w_ih_b, w_hh_b, b_ih_b, b_hh_b = layer_p["bwd"]
        gx_f = _input_projection(parts, w_ih_f, b_ih_f, b_hh_f)
        gx_b = _input_projection(parts, w_ih_b, b_ih_b, b_hh_b)
        whh_f_t = jnp.asarray(w_hh_f.T, jnp.bfloat16)
        whh_b_t = jnp.asarray(w_hh_b.T, jnp.bfloat16)
        out_f, out_b = bilstm_layer_recurrence(gx_f, gx_b, whh_f_t, whh_b_t)
        parts = [out_f, out_b]
    out = jnp.concatenate(parts, axis=-1)            # [L, N, 2H], only once at the end
    return jnp.transpose(out, (1, 0, 2))             # [N, L, 2H]


# ---------------- pure-JAX f32 reference (for correctness check) ------------ #
def _ref_lstm_dir(x_lnd, w_ih, w_hh, b_ih, b_hh, reverse):
    L, N, D = x_lnd.shape
    H = w_hh.shape[1]
    xs = x_lnd[::-1] if reverse else x_lnd

    def step(carry, x_t):
        h, c = carry
        gates = x_t @ w_ih.T + h @ w_hh.T + b_ih + b_hh
        i, f, g, o = jnp.split(gates, 4, axis=-1)
        i = jax.nn.sigmoid(i)
        f = jax.nn.sigmoid(f)
        g = jnp.tanh(g)
        o = jax.nn.sigmoid(o)
        c = f * c + i * g
        h = o * jnp.tanh(c)
        return (h, c), h

    init = (jnp.zeros((N, H), jnp.float32), jnp.zeros((N, H), jnp.float32))
    _, ys = jax.lax.scan(step, init, xs)
    return ys[::-1] if reverse else ys


def _ref_bilstm(x, params):
    h = jnp.transpose(x, (1, 0, 2))
    for layer_p in params:
        fwd = _ref_lstm_dir(h, *layer_p["fwd"], reverse=False)
        bwd = _ref_lstm_dir(h, *layer_p["bwd"], reverse=True)
        h = jnp.concatenate([fwd, bwd], axis=-1)
    return jnp.transpose(h, (1, 0, 2))


if __name__ == "__main__":
    N, L, D, H, NUM_LAYERS = 2, 8, 16, 32, 2

    key = jax.random.PRNGKey(0)
    key, xkey, pkey = jax.random.split(key, 3)
    x = jax.random.normal(xkey, (N, L, D), jnp.float32)
    params = init_bilstm_params(pkey, input_dim=D, hidden_dim=H, num_layers=NUM_LAYERS)

    run = jax.jit(time_series_bilstm)
    out = jax.block_until_ready(run(x, params))
    assert out.shape == (N, L, 2 * H), out.shape

    ref = jax.block_until_ready(_ref_bilstm(x, params))
    # bf16 matmul operands (f32 accumulation) vs. pure-f32 reference -> loose tol.
    assert jnp.allclose(out, ref, atol=3e-2, rtol=3e-2), float(jnp.max(jnp.abs(out - ref)))

    print("KERNEL_OK")
</pallas_src>

<mosaic_0001>
module attributes {stable_mosaic.version = 11 : i64} {
  func.func @_bilstm_recurrence_kernel(%arg0: i32, %arg1: memref<8x2x128xf32, #tpu.memory_space<vmem>>, %arg2: memref<8x2x128xf32, #tpu.memory_space<vmem>>, %arg3: memref<32x128xbf16, #tpu.memory_space<vmem>>, %arg4: memref<32x128xbf16, #tpu.memory_space<vmem>>, %arg5: memref<8x2x32xf32, #tpu.memory_space<vmem>>, %arg6: memref<8x2x32xf32, #tpu.memory_space<vmem>>, %arg7: memref<2x32xf32, #tpu.memory_space<vmem>>, %arg8: memref<2x32xf32, #tpu.memory_space<vmem>>, %arg9: memref<2x32xf32, #tpu.memory_space<vmem>>, %arg10: memref<2x32xf32, #tpu.memory_space<vmem>>) attributes {dimension_semantics = [#tpu.dimension_semantics<arbitrary>], iteration_bounds = array<i64: 1>, scalar_prefetch = 0 : i64, scratch_operands = 4 : i64, tpu.core_type = #tpu.core_type<tc>, window_params = [{pipeline_mode = #tpu.pipeline_mode<synchronous>, transform_indices = @transform_0, window_bounds = array<i64: 8, 2, 128>}, {pipeline_mode = #tpu.pipeline_mode<synchronous>, transform_indices = @transform_1, window_bounds = array<i64: 8, 2, 128>}, {pipeline_mode = #tpu.pipeline_mode<synchronous>, transform_indices = @transform_2, window_bounds = array<i64: 32, 128>}, {pipeline_mode = #tpu.pipeline_mode<synchronous>, transform_indices = @transform_3, window_bounds = array<i64: 32, 128>}, {pipeline_mode = #tpu.pipeline_mode<synchronous>, transform_indices = @transform_4, window_bounds = array<i64: 8, 2, 32>}, {pipeline_mode = #tpu.pipeline_mode<synchronous>, transform_indices = @transform_5, window_bounds = array<i64: 8, 2, 32>}]} {
    %cst = arith.constant 0.000000e+00 : f32
    %0 = vector.broadcast %cst : f32 to vector<2x32xf32>
    %c0 = arith.constant 0 : index
    %c0_0 = arith.constant 0 : index
    %1 = vector.load %arg7[%c0, %c0_0] : memref<2x32xf32, #tpu.memory_space<vmem>>, vector<2x32xf32>
    tpu.vector_store %arg7[%c0, %c0_0], %0 {strides = array<i32>} : memref<2x32xf32, #tpu.memory_space<vmem>>, vector<2x32xf32>,
    %cst_1 = arith.constant 0.000000e+00 : f32
    %2 = vector.broadcast %cst_1 : f32 to vector<2x32xf32>
    %c0_2 = arith.constant 0 : index
    %c0_3 = arith.constant 0 : index
    %3 = vector.load %arg8[%c0_2, %c0_3] : memref<2x32xf32, #tpu.memory_space<vmem>>, vector<2x32xf32>
    tpu.vector_store %arg8[%c0_2, %c0_3], %2 {strides = array<i32>} : memref<2x32xf32, #tpu.memory_space<vmem>>, vector<2x32xf32>,
    %cst_4 = arith.constant 0.000000e+00 : f32
    %4 = vector.broadcast %cst_4 : f32 to vector<2x32xf32>
    %c0_5 = arith.constant 0 : index
    %c0_6 = arith.constant 0 : index
    %5 = vector.load %arg9[%c0_5, %c0_6] : memref<2x32xf32, #tpu.memory_space<vmem>>, vector<2x32xf32>
    tpu.vector_store %arg9[%c0_5, %c0_6], %4 {strides = array<i32>} : memref<2x32xf32, #tpu.memory_space<vmem>>, vector<2x32xf32>,
    %cst_7 = arith.constant 0.000000e+00 : f32
    %6 = vector.broadcast %cst_7 : f32 to vector<2x32xf32>
    %c0_8 = arith.constant 0 : index
    %c0_9 = arith.constant 0 : index
    %7 = vector.load %arg10[%c0_8, %c0_9] : memref<2x32xf32, #tpu.memory_space<vmem>>, vector<2x32xf32>
    tpu.vector_store %arg10[%c0_8, %c0_9], %6 {strides = array<i32>} : memref<2x32xf32, #tpu.memory_space<vmem>>, vector<2x32xf32>,
    %c0_10 = arith.constant 0 : index
    %c0_11 = arith.constant 0 : index
    %8 = vector.load %arg3[%c0_10, %c0_11] : memref<32x128xbf16, #tpu.memory_space<vmem>>, vector<32x128xbf16>
    %c0_12 = arith.constant 0 : index
    %c0_13 = arith.constant 0 : index
    %9 = vector.load %arg4[%c0_12, %c0_13] : memref<32x128xbf16, #tpu.memory_space<vmem>>, vector<32x128xbf16>
    %c0_i32 = arith.constant 0 : i32
    %c7_i32 = arith.constant 7 : i32
    %10 = arith.subi %c7_i32, %c0_i32 : i32
    %11 = arith.index_cast %c0_i32 : i32 to index
    %c0_14 = arith.constant 0 : index
    %c0_15 = arith.constant 0 : index
    %12 = vector.load %arg1[%11, %c0_14, %c0_15] : memref<8x2x128xf32, #tpu.memory_space<vmem>>, vector<1x2x128xf32>
    %13 = vector.shape_cast %12 : vector<1x2x128xf32> to vector<2x128xf32>
    %c0_16 = arith.constant 0 : index
    %c0_17 = arith.constant 0 : index
    %14 = vector.load %arg7[%c0_16, %c0_17] : memref<2x32xf32, #tpu.memory_space<vmem>>, vector<2x32xf32>
    %15 = arith.truncf %14 : vector<2x32xf32> to vector<2x32xbf16>
    %cst_18 = arith.constant dense<0.000000e+00> : vector<2x128xf32>
    %16 = tpu.matmul %15, %8, %cst_18 {dimension_numbers = #tpu.dot_dimension_numbers<[1], [0], [0], [1], [0, 0, 1, 1], [], []>} : vector<2x32xbf16>, vector<32x128xbf16>, vector<2x128xf32> -> vector<2x128xf32>
    %17 = arith.addf %13, %16 : vector<2x128xf32>
    %18 = arith.index_cast %10 : i32 to index
    %c0_19 = arith.constant 0 : index
    %c0_20 = arith.constant 0 : index
    %19 = vector.load %arg2[%18, %c0_19, %c0_20] : memref<8x2x128xf32, #tpu.memory_space<vmem>>, vector<1x2x128xf32>
    %20 = vector.shape_cast %19 : vector<1x2x128xf32> to vector<2x128xf32>
    %c0_21 = arith.constant 0 : index
    %c0_22 = arith.constant 0 : index
    %21 = vector.load %arg9[%c0_21, %c0_22] : memref<2x32xf32, #tpu.memory_space<vmem>>, vector<2x32xf32>
    %22 = arith.truncf %21 : vector<2x32xf32> to vector<2x32xbf16>
    %cst_23 = arith.constant dense<0.000000e+00> : vector<2x128xf32>
    %23 = tpu.matmul %22, %9, %cst_23 {dimension_numbers = #tpu.dot_dimension_numbers<[1], [0], [0], [1], [0, 0, 1, 1], [], []>} : vector<2x32xbf16>, vector<32x128xbf16>, vector<2x128xf32> -> vector<2x128xf32>
    %24 = arith.addf %20, %23 : vector<2x128xf32>
    %c0_24 = arith.constant 0 : index
    %c0_25 = arith.constant 0 : index
    %25 = vector.load %arg8[%c0_24, %c0_25] : memref<2x32xf32, #tpu.memory_space<vmem>>, vector<2x32xf32>
    %26 = vector.extract_strided_slice %17 {offsets = [0, 0], sizes = [2, 32], strides = [1, 1]} : vector<2x128xf32> to vector<2x32xf32>
    %27 = arith.negf %26 : vector<2x32xf32>
    %28 = math.exp %27 : vector<2x32xf32>
    %cst_26 = arith.constant 1.000000e+00 : f32
    %29 = vector.broadcast %cst_26 : f32 to vector<2x32xf32>
    %30 = arith.addf %29, %28 : vector<2x32xf32>
    %31 = arith.divf %29, %30 : vector<2x32xf32>
    %32 = vector.extract_strided_slice %17 {offsets = [0, 32], sizes = [2, 32], strides = [1, 1]} : vector<2x128xf32> to vector<2x32xf32>
    %33 = arith.negf %32 : vector<2x32xf32>
    %34 = math.exp %33 : vector<2x32xf32>
    %cst_27 = arith.constant 1.000000e+00 : f32
    %35 = vector.broadcast %cst_27 : f32 to vector<2x32xf32>
    %36 = arith.addf %35, %34 : vector<2x32xf32>
    %37 = arith.divf %35, %36 : vector<2x32xf32>
    %38 = vector.extract_strided_slice %17 {offsets = [0, 64], sizes = [2, 32], strides = [1, 1]} : vector<2x128xf32> to vector<2x32xf32>
    %39 = math.tanh %38 : vector<2x32xf32>
    %40 = vector.extract_strided_slice %17 {offsets = [0, 96], sizes = [2, 32], strides = [1, 1]} : vector<2x128xf32> to vector<2x32xf32>
    %41 = arith.negf %40 : vector<2x32xf32>
    %42 = math.exp %41 : vector<2x32xf32>
    %cst_28 = arith.constant 1.000000e+00 : f32
    %43 = vector.broadcast %cst_28 : f32 to vector<2x32xf32>
    %44 = arith.addf %43, %42 : vector<2x32xf32>
    %45 = arith.divf %43, %44 : vector<2x32xf32>
    %46 = arith.mulf %37, %25 : vector<2x32xf32>
    %47 = arith.mulf %31, %39 : vector<2x32xf32>
    %48 = arith.addf %46, %47 : vector<2x32xf32>
    %49 = math.tanh %48 : vector<2x32xf32>
    %50 = arith.mulf %45, %49 : vector<2x32xf32>
    %c0_29 = arith.constant 0 : index
    %c0_30 = arith.constant 0 : index
    %51 = vector.load %arg10[%c0_29, %c0_30] : memref<2x32xf32, #tpu.memory_space<vmem>>, vector<2x32xf32>
    %52 = vector.extract_strided_slice %24 {offsets = [0, 0], sizes = [2, 32], strides = [1, 1]} : vector<2x128xf32> to vector<2x32xf32>
    %53 = arith.negf %52 : vector<2x32xf32>
    %54 = math.exp %53 : vector<2x32xf32>
    %cst_31 = arith.constant 1.000000e+00 : f32
    %55 = vector.broadcast %cst_31 : f32 to vector<2x32xf32>
    %56 = arith.addf %55, %54 : vector<2x32xf32>
    %57 = arith.divf %55, %56 : vector<2x32xf32>
    %58 = vector.extract_strided_slice %24 {offsets = [0, 32], sizes = [2, 32], strides = [1, 1]} : vector<2x128xf32> to vector<2x32xf32>
    %59 = arith.negf %58 : vector<2x32xf32>
    %60 = math.exp %59 : vector<2x32xf32>
    %cst_32 = arith.constant 1.000000e+00 : f32
    %61 = vector.broadcast %cst_32 : f32 to vector<2x32xf32>
    %62 = arith.addf %61, %60 : vector<2x32xf32>
    %63 = arith.divf %61, %62 : vector<2x32xf32>
    %64 = vector.extract_strided_slice %24 {offsets = [0, 64], sizes = [2, 32], strides = [1, 1]} : vector<2x128xf32> to vector<2x32xf32>
    %65 = math.tanh %64 : vector<2x32xf32>
    %66 = vector.extract_strided_slice %24 {offsets = [0, 96], sizes = [2, 32], strides = [1, 1]} : vector<2x128xf32> to vector<2x32xf32>
    %67 = arith.negf %66 : vector<2x32xf32>
    %68 = math.exp %67 : vector<2x32xf32>
    %cst_33 = arith.constant 1.000000e+00 : f32
    %69 = vector.broadcast %cst_33 : f32 to vector<2x32xf32>
    %70 = arith.addf %69, %68 : vector<2x32xf32>
    %71 = arith.divf %69, %70 : vector<2x32xf32>
    %72 = arith.mulf %63, %51 : vector<2x32xf32>
    %73 = arith.mulf %57, %65 : vector<2x32xf32>
    %74 = arith.addf %72, %73 : vector<2x32xf32>
    %75 = math.tanh %74 : vector<2x32xf32>
    %76 = arith.mulf %71, %75 : vector<2x32xf32>
    %c0_34 = arith.constant 0 : index
    %c0_35 = arith.constant 0 : index
    %77 = vector.load %arg7[%c0_34, %c0_35] : memref<2x32xf32, #tpu.memory_space<vmem>>, vector<2x32xf32>
    tpu.vector_store %arg7[%c0_34, %c0_35], %50 {strides = array<i32>} : memref<2x32xf32, #tpu.memory_space<vmem>>, vector<2x32xf32>,
    %c0_36 = arith.constant 0 : index
    %c0_37 = arith.constant 0 : index
    %78 = vector.load %arg8[%c0_36, %c0_37] : memref<2x32xf32, #tpu.memory_space<vmem>>, vector<2x32xf32>
    tpu.vector_store %arg8[%c0_36, %c0_37], %48 {strides = array<i32>} : memref<2x32xf32, #tpu.memory_space<vmem>>, vector<2x32xf32>,
    %c0_38 = arith.constant 0 : index
    %c0_39 = arith.constant 0 : index
    %79 = vector.load %arg9[%c0_38, %c0_39] : memref<2x32xf32, #tpu.memory_space<vmem>>, vector<2x32xf32>
    tpu.vector_store %arg9[%c0_38, %c0_39], %76 {strides = array<i32>} : memref<2x32xf32, #tpu.memory_space<vmem>>, vector<2x32xf32>,
    %c0_40 = arith.constant 0 : index
    %c0_41 = arith.constant 0 : index
    %80 = vector.load %arg10[%c0_40, %c0_41] : memref<2x32xf32, #tpu.memory_space<vmem>>, vector<2x32xf32>
    tpu.vector_store %arg10[%c0_40, %c0_41], %74 {strides = array<i32>} : memref<2x32xf32, #tpu.memory_space<vmem>>, vector<2x32xf32>,
    %81 = arith.index_cast %c0_i32 : i32 to index
    %c0_42 = arith.constant 0 : index
    %c0_43 = arith.constant 0 : index
    %82 = vector.load %arg5[%81, %c0_42, %c0_43] : memref<8x2x32xf32, #tpu.memory_space<vmem>>, vector<1x2x32xf32>
    %83 = vector.shape_cast %82 : vector<1x2x32xf32> to vector<2x32xf32>
    %84 = vector.shape_cast %50 : vector<2x32xf32> to vector<1x2x32xf32>
    tpu.vector_store %arg5[%81, %c0_42, %c0_43], %84 {strides = array<i32>} : memref<8x2x32xf32, #tpu.memory_space<vmem>>, vector<1x2x32xf32>,
    %85 = arith.index_cast %10 : i32 to index
    %c0_44 = arith.constant 0 : index
    %c0_45 = arith.constant 0 : index
    %86 = vector.load %arg6[%85, %c0_44, %c0_45] : memref<8x2x32xf32, #tpu.memory_space<vmem>>, vector<1x2x32xf32>
    %87 = vector.shape_cast %86 : vector<1x2x32xf32> to vector<2x32xf32>
    %88 = vector.shape_cast %76 : vector<2x32xf32> to vector<1x2x32xf32>
    tpu.vector_store %arg6[%85, %c0_44, %c0_45], %88 {strides = array<i32>} : memref<8x2x32xf32, #tpu.memory_space<vmem>>, vector<1x2x32xf32>,
    %c1_i32 = arith.constant 1 : i32
    %c7_i32_46 = arith.constant 7 : i32
    %89 = arith.subi %c7_i32_46, %c1_i32 : i32
    %90 = arith.index_cast %c1_i32 : i32 to index
    %c0_47 = arith.constant 0 : index
    %c0_48 = arith.constant 0 : index
    %91 = vector.load %arg1[%90, %c0_47, %c0_48] : memref<8x2x128xf32, #tpu.memory_space<vmem>>, vector<1x2x128xf32>
    %92 = vector.shape_cast %91 : vector<1x2x128xf32> to vector<2x128xf32>
    %c0_49 = arith.constant 0 : index
    %c0_50 = arith.constant 0 : index
    %93 = vector.load %arg7[%c0_49, %c0_50] : memref<2x32xf32, #tpu.memory_space<vmem>>, vector<2x32xf32>
    %94 = arith.truncf %93 : vector<2x32xf32> to vector<2x32xbf16>
    %cst_51 = arith.constant dense<0.000000e+00> : vector<2x128xf32>
    %95 = tpu.matmul %94, %8, %cst_51 {dimension_numbers = #tpu.dot_dimension_numbers<[1], [0], [0], [1], [0, 0, 1, 1], [], []>} : vector<2x32xbf16>, vector<32x128xbf16>, vector<2x128xf32> -> vector<2x128xf32>
    %96 = arith.addf %92, %95 : vector<2x128xf32>
    %97 = arith.index_cast %89 : i32 to index
    %c0_52 = arith.constant 0 : index
    %c0_53 = arith.constant 0 : index
    %98 = vector.load %arg2[%97, %c0_52, %c0_53] : memref<8x2x128xf32, #tpu.memory_space<vmem>>, vector<1x2x128xf32>
    %99 = vector.shape_cast %98 : vector<1x2x128xf32> to vector<2x128xf32>
    %c0_54 = arith.constant 0 : index
    %c0_55 = arith.constant 0 : index
    %100 = vector.load %arg9[%c0_54, %c0_55] : memref<2x32xf32, #tpu.memory_space<vmem>>, vector<2x32xf32>
    %101 = arith.truncf %100 : vector<2x32xf32> to vector<2x32xbf16>
    %cst_56 = arith.constant dense<0.000000e+00> : vector<2x128xf32>
    %102 = tpu.matmul %101, %9, %cst_56 {dimension_numbers = #tpu.dot_dimension_numbers<[1], [0], [0], [1], [0, 0, 1, 1], [], []>} : vector<2x32xbf16>, vector<32x128xbf16>, vector<2x128xf32> -> vector<2x128xf32>
    %103 = arith.addf %99, %102 : vector<2x128xf32>
    %c0_57 = arith.constant 0 : index
    %c0_58 = arith.constant 0 : index
    %104 = vector.load %arg8[%c0_57, %c0_58] : memref<2x32xf32, #tpu.memory_space<vmem>>, vector<2x32xf32>
    %105 = vector.extract_strided_slice %96 {offsets = [0, 0], sizes = [2, 32], strides = [1, 1]} : vector<2x128xf32> to vector<2x32xf32>
    %106 = arith.negf %105 : vector<2x32xf32>
    %107 = math.exp %106 : vector<2x32xf32>
    %cst_59 = arith.constant 1.000000e+00 : f32
    %108 = vector.broadcast %cst_59 : f32 to vector<2x32xf32>
    %109 = arith.addf %108, %107 : vector<2x32xf32>
    %110 = arith.divf %108, %109 : vector<2x32xf32>
    %111 = vector.extract_strided_slice %96 {offsets = [0, 32], sizes = [2, 32], strides = [1, 1]} : vector<2x128xf32> to vector<2x32xf32>
    %112 = arith.negf %111 : vector<2x32xf32>
    %113 = math.exp %112 : vector<2x32xf32>
    %cst_60 = arith.constant 1.000000e+00 : f32
    %114 = vector.broadcast %cst_60 : f32 to vector<2x32xf32>
    %115 = arith.addf %114, %113 : vector<2x32xf32>
    %116 = arith.divf %114, %115 : vector<2x32xf32>
    %117 = vector.extract_strided_slice %96 {offsets = [0, 64], sizes = [2, 32], strides = [1, 1]} : vector<2x128xf32> to vector<2x32xf32>
    %118 = math.tanh %117 : vector<2x32xf32>
    %119 = vector.extract_strided_slice %96 {offsets = [0, 96], sizes = [2, 32], strides = [1, 1]} : vector<2x128xf32> to vector<2x32xf32>
    %120 = arith.negf %119 : vector<2x32xf32>
    %121 = math.exp %120 : vector<2x32xf32>
    %cst_61 = arith.constant 1.000000e+00 : f32
    %122 = vector.broadcast %cst_61 : f32 to vector<2x32xf32>
    %123 = arith.addf %122, %121 : vector<2x32xf32>
    %124 = arith.divf %122, %123 : vector<2x32xf32>
    %125 = arith.mulf %116, %104 : vector<2x32xf32>
    %126 = arith.mulf %110, %118 : vector<2x32xf32>
    %127 = arith.addf %125, %126 : vector<2x32xf32>
    %128 = math.tanh %127 : vector<2x32xf32>
    %129 = arith.mulf %124, %128 : vector<2x32xf32>
    %c0_62 = arith.constant 0 : index
    %c0_63 = arith.constant 0 : index
    %130 = vector.load %arg10[%c0_62, %c0_63] : memref<2x32xf32, #tpu.memory_space<vmem>>, vector<2x32xf32>
    %131 = vector.extract_strided_slice %103 {offsets = [0, 0], sizes = [2, 32], strides = [1, 1]} : vector<2x128xf32> to vector<2x32xf32>
    %132 = arith.negf %131 : vector<2x32xf32>
    %133 = math.exp %132 : vector<2x32xf32>
    %cst_64 = arith.constant 1.000000e+00 : f32
    %134 = vector.broadcast %cst_64 : f32 to vector<2x32xf32>
    %135 = arith.addf %134, %133 : vector<2x32xf32>
    %136 = arith.divf %134, %135 : vector<2x32xf32>
    %137 = vector.extract_strided_slice %103 {offsets = [0, 32], sizes = [2, 32], strides = [1, 1]} : vector<2x128xf32> to vector<2x32xf32>
    %138 = arith.negf %137 : vector<2x32xf32>
    %139 = math.exp %138 : vector<2x32xf32>
    %cst_65 = arith.constant 1.000000e+00 : f32
    %140 = vector.broadcast %cst_65 : f32 to vector<2x32xf32>
    %141 = arith.addf %140, %139 : vector<2x32xf32>
    %142 = arith.divf %140, %141 : vector<2x32xf32>
    %143 = vector.extract_strided_slice %103 {offsets = [0, 64], sizes = [2, 32], strides = [1, 1]} : vector<2x128xf32> to vector<2x32xf32>
    %144 = math.tanh %143 : vector<2x32xf32>
    %145 = vector.extract_strided_slice %103 {offsets = [0, 96], sizes = [2, 32], strides = [1, 1]} : vector<2x128xf32> to vector<2x32xf32>
    %146 = arith.negf %145 : vector<2x32xf32>
    %147 = math.exp %146 : vector<2x32xf32>
    %cst_66 = arith.constant 1.000000e+00 : f32
    %148 = vector.broadcast %cst_66 : f32 to vector<2x32xf32>
    %149 = arith.addf %148, %147 : vector<2x32xf32>
    %150 = arith.divf %148, %149 : vector<2x32xf32>
    %151 = arith.mulf %142, %130 : vector<2x32xf32>
    %152 = arith.mulf %136, %144 : vector<2x32xf32>
    %153 = arith.addf %151, %152 : vector<2x32xf32>
    %154 = math.tanh %153 : vector<2x32xf32>
    %155 = arith.mulf %150, %154 : vector<2x32xf32>
    %c0_67 = arith.constant 0 : index
    %c0_68 = arith.constant 0 : index
    %156 = vector.load %arg7[%c0_67, %c0_68] : memref<2x32xf32, #tpu.memory_space<vmem>>, vector<2x32xf32>
    tpu.vector_store %arg7[%c0_67, %c0_68], %129 {strides = array<i32>} : memref<2x32xf32, #tpu.memory_space<vmem>>, vector<2x32xf32>,
    %c0_69 = arith.constant 0 : index
    %c0_70 = arith.constant 0 : index
    %157 = vector.load %arg8[%c0_69, %c0_70] : memref<2x32xf32, #tpu.memory_space<vmem>>, vector<2x32xf32>
    tpu.vector_store %arg8[%c0_69, %c0_70], %127 {strides = array<i32>} : memref<2x32xf32, #tpu.memory_space<vmem>>, vector<2x32xf32>,
    %c0_71 = arith.constant 0 : index
    %c0_72 = arith.constant 0 : index
    %158 = vector.load %arg9[%c0_71, %c0_72] : memref<2x32xf32, #tpu.memory_space<vmem>>, vector<2x32xf32>
    tpu.vector_store %arg9[%c0_71, %c0_72], %155 {strides = array<i32>} : memref<2x32xf32, #tpu.memory_space<vmem>>, vector<2x32xf32>,
    %c0_73 = arith.constant 0 : index
    %c0_74 = arith.constant 0 : index
    %159 = vector.load %arg10[%c0_73, %c0_74] : memref<2x32xf32, #tpu.memory_space<vmem>>, vector<2x32xf32>
    tpu.vector_store %arg10[%c0_73, %c0_74], %153 {strides = array<i32>} : memref<2x32xf32, #tpu.memory_space<vmem>>, vector<2x32xf32>,
    %160 = arith.index_cast %c1_i32 : i32 to index
    %c0_75 = arith.constant 0 : index
    %c0_76 = arith.constant 0 : index
    %161 = vector.load %arg5[%160, %c0_75, %c0_76] : memref<8x2x32xf32, #tpu.memory_space<vmem>>, vector<1x2x32xf32>
    %162 = vector.shape_cast %161 : vector<1x2x32xf32> to vector<2x32xf32>
    %163 = vector.shape_cast %129 : vector<2x32xf32> to vector<1x2x32xf32>
    tpu.vector_store %arg5[%160, %c0_75, %c0_76], %163 {strides = array<i32>} : memref<8x2x32xf32, #tpu.memory_space<vmem>>, vector<1x2x32xf32>,
    %164 = arith.index_cast %89 : i32 to index
    %c0_77 = arith.constant 0 : index
    %c0_78 = arith.constant 0 : index
    %165 = vector.load %arg6[%164, %c0_77, %c0_78] : memref<8x2x32xf32, #tpu.memory_space<vmem>>, vector<1x2x32xf32>
    %166 = vector.shape_cast %165 : vector<1x2x32xf32> to vector<2x32xf32>
    %167 = vector.shape_cast %155 : vector<2x32xf32> to vector<1x2x32xf32>
    tpu.vector_store %arg6[%164, %c0_77, %c0_78], %167 {strides = array<i32>} : memref<8x2x32xf32, #tpu.memory_space<vmem>>, vector<1x2x32xf32>,
    %c2_i32 = arith.constant 2 : i32
    %c7_i32_79 = arith.constant 7 : i32
    %168 = arith.subi %c7_i32_79, %c2_i32 : i32
    %169 = arith.index_cast %c2_i32 : i32 to index
    %c0_80 = arith.constant 0 : index
    %c0_81 = arith.constant 0 : index
    %170 = vector.load %arg1[%169, %c0_80, %c0_81] : memref<8x2x128xf32, #tpu.memory_space<vmem>>, vector<1x2x128xf32>
    %171 = vector.shape_cast %170 : vector<1x2x128xf32> to vector<2x128xf32>
    %c0_82 = arith.constant 0 : index
    %c0_83 = arith.constant 0 : index
    %172 = vector.load %arg7[%c0_82, %c0_83] : memref<2x32xf32, #tpu.memory_space<vmem>>, vector<2x32xf32>
    %173 = arith.truncf %172 : vector<2x32xf32> to vector<2x32xbf16>
    %cst_84 = arith.constant dense<0.000000e+00> : vector<2x128xf32>
    %174 = tpu.matmul %173, %8, %cst_84 {dimension_numbers = #tpu.dot_dimension_numbers<[1], [0], [0], [1], [0, 0, 1, 1], [], []>} : vector<2x32xbf16>, vector<32x128xbf16>, vector<2x128xf32> -> vector<2x128xf32>
    %175 = arith.addf %171, %174 : vector<2x128xf32>
    %176 = arith.index_cast %168 : i32 to index
    %c0_85 = arith.constant 0 : index
    %c0_86 = arith.constant 0 : index
    %177 = vector.load %arg2[%176, %c0_85, %c0_86] : memref<8x2x128xf32, #tpu.memory_space<vmem>>, vector<1x2x128xf32>
    %178 = vector.shape_cast %177 : vector<1x2x128xf32> to vector<2x128xf32>
    %c0_87 = arith.constant 0 : index
    %c0_88 = arith.constant 0 : index
    %179 = vector.load %arg9[%c0_87, %c0_88] : memref<2x32xf32, #tpu.memory_space<vmem>>, vector<2x32xf32>
    %180 = arith.truncf %179 : vector<2x32xf32> to vector<2x32xbf16>
    %cst_89 = arith.constant dense<0.000000e+00> : vector<2x128xf32>
    %181 = tpu.matmul %180, %9, %cst_89 {dimension_numbers = #tpu.dot_dimension_numbers<[1], [0], [0], [1], [0, 0, 1, 1], [], []>} : vector<2x32xbf16>, vector<32x128xbf16>, vector<2x128xf32> -> vector<2x128xf32>
    %182 = arith.addf %178, %181 : vector<2x128xf32>
    %c0_90 = arith.constant 0 : index
    %c0_91 = arith.constant 0 : index
    %183 = vector.load %arg8[%c0_90, %c0_91] : memref<2x32xf32, #tpu.memory_space<vmem>>, vector<2x32xf32>
    %184 = vector.extract_strided_slice %175 {offsets = [0, 0], sizes = [2, 32], strides = [1, 1]} : vector<2x128xf32> to vector<2x32xf32>
    %185 = arith.negf %184 : vector<2x32xf32>
    %186 = math.exp %185 : vector<2x32xf32>
    %cst_92 = arith.constant 1.000000e+00 : f32
    %187 = vector.broadcast %cst_92 : f32 to vector<2x32xf32>
    %188 = arith.addf %187, %186 : vector<2x32xf32>
    %189 = arith.divf %187, %188 : vector<2x32xf32>
    %190 = vector.extract_strided_slice %175 {offsets = [0, 32], sizes = [2, 32], strides = [1, 1]} : vector<2x128xf32> to vector<2x32xf32>
    %191 = arith.negf %190 : vector<2x32xf32>
    %192 = math.exp %191 : vector<2x32xf32>
    %cst_93 = arith.constant 1.000000e+00 : f32
    %193 = vector.broadcast %cst_93 : f32 to vector<2x32xf32>
    %194 = arith.addf %193, %192 : vector<2x32xf32>
    %195 = arith.divf %193, %194 : vector<2x32xf32>
    %196 = vector.extract_strided_slice %175 {offsets = [0, 64], sizes = [2, 32], strides = [1, 1]} : vector<2x128xf32> to vector<2x32xf32>
    %197 = math.tanh %196 : vector<2x32xf32>
    %198 = vector.extract_strided_slice %175 {offsets = [0, 96], sizes = [2, 32], strides = [1, 1]} : vector<2x128xf32> to vector<2x32xf32>
    %199 = arith.negf %198 : vector<2x32xf32>
    %200 = math.exp %199 : vector<2x32xf32>
    %cst_94 = arith.constant 1.000000e+00 : f32
    %201 = vector.broadcast %cst_94 : f32 to vector<2x32xf32>
    %202 = arith.addf %201, %200 : vector<2x32xf32>
    %203 = arith.divf %201, %202 : vector<2x32xf32>
    %204 = arith.mulf %195, %183 : vector<2x32xf32>
    %205 = arith.mulf %189, %197 : vector<2x32xf32>
    %206 = arith.addf %204, %205 : vector<2x32xf32>
    %207 = math.tanh %206 : vector<2x32xf32>
    %208 = arith.mulf %203, %207 : vector<2x32xf32>
    %c0_95 = arith.constant 0 : index
    %c0_96 = arith.constant 0 : index
    %209 = vector.load %arg10[%c0_95, %c0_96] : memref<2x32xf32, #tpu.memory_space<vmem>>, vector<2x32xf32>
    %210 = vector.extract_strided_slice %182 {offsets = [0, 0], sizes = [2, 32], strides = [1, 1]} : vector<2x128xf32> to vector<2x32xf32>
    %211 = arith.negf %210 : vector<2x32xf32>
    %212 = math.exp %211 : vector<2x32xf32>
    %cst_97 = arith.constant 1.000000e+00 : f32
    %213 = vector.broadcast %cst_97 : f32 to vector<2x32xf32>
    %214 = arith.addf %213, %212 : vector<2x32xf32>
    %215 = arith.divf %213, %214 : vector<2x32xf32>
    %216 = vector.extract_strided_slice %182 {offsets = [0, 32], sizes = [2, 32], strides = [1, 1]} : vector<2x128xf32> to vector<2x32xf32>
    %217 = arith.negf %216 : vector<2x32xf32>
    %218 = math.exp %217 : vector<2x32xf32>
    %cst_98 = arith.constant 1.000000e+00 : f32
    %219 = vector.broadcast %cst_98 : f32 to vector<2x32xf32>
    %220 = arith.addf %219, %218 : vector<2x32xf32>
    %221 = arith.divf %219, %220 : vector<2x32xf32>
    %222 = vector.extract_strided_slice %182 {offsets = [0, 64], sizes = [2, 32], strides = [1, 1]} : vector<2x128xf32> to vector<2x32xf32>
    %223 = math.tanh %222 : vector<2x32xf32>
    %224 = vector.extract_strided_slice %182 {offsets = [0, 96], sizes = [2, 32], strides = [1, 1]} : vector<2x128xf32> to vector<2x32xf32>
    %225 = arith.negf %224 : vector<2x32xf32>
    %226 = math.exp %225 : vector<2x32xf32>
    %cst_99 = arith.constant 1.000000e+00 : f32
    %227 = vector.broadcast %cst_99 : f32 to vector<2x32xf32>
    %228 = arith.addf %227, %226 : vector<2x32xf32>
    %229 = arith.divf %227, %228 : vector<2x32xf32>
    %230 = arith.mulf %221, %209 : vector<2x32xf32>
    %231 = arith.mulf %215, %223 : vector<2x32xf32>
    %232 = arith.addf %230, %231 : vector<2x32xf32>
    %233 = math.tanh %232 : vector<2x32xf32>
    %234 = arith.mulf %229, %233 : vector<2x32xf32>
    %c0_100 = arith.constant 0 : index
    %c0_101 = arith.constant 0 : index
    %235 = vector.load %arg7[%c0_100, %c0_101] : memref<2x32xf32, #tpu.memory_space<vmem>>, vector<2x32xf32>
    tpu.vector_store %arg7[%c0_100, %c0_101], %208 {strides = array<i32>} : memref<2x32xf32, #tpu.memory_space<vmem>>, vector<2x32xf32>,
    %c0_102 = arith.constant 0 : index
    %c0_103 = arith.constant 0 : index
    %236 = vector.load %arg8[%c0_102, %c0_103] : memref<2x32xf32, #tpu.memory_space<vmem>>, vector<2x32xf32>
    tpu.vector_store %arg8[%c0_102, %c0_103], %206 {strides = array<i32>} : memref<2x32xf32, #tpu.memory_space<vmem>>, vector<2x32xf32>,
    %c0_104 = arith.constant 0 : index
    %c0_105 = arith.constant 0 : index
    %237 = vector.load %arg9[%c0_104, %c0_105] : memref<2x32xf32, #tpu.memory_space<vmem>>, vector<2x32xf32>
    tpu.vector_store %arg9[%c0_104, %c0_105], %234 {strides = array<i32>} : memref<2x32xf32, #tpu.memory_space<vmem>>, vector<2x32xf32>,
    %c0_106 = arith.constant 0 : index
    %c0_107 = arith.constant 0 : index
    %238 = vector.load %arg10[%c0_106, %c0_107] : memref<2x32xf32, #tpu.memory_space<vmem>>, vector<2x32xf32>
    tpu.vector_store %arg10[%c0_106, %c0_107], %232 {strides = array<i32>} : memref<2x32xf32, #tpu.memory_space<vmem>>, vector<2x32xf32>,
    %239 = arith.index_cast %c2_i32 : i32 to index
    %c0_108 = arith.constant 0 : index
    %c0_109 = arith.constant 0 : index
    %240 = vector.load %arg5[%239, %c0_108, %c0_109] : memref<8x2x32xf32, #tpu.memory_space<vmem>>, vector<1x2x32xf32>
    %241 = vector.shape_cast %240 : vector<1x2x32xf32> to vector<2x32xf32>
    %242 = vector.shape_cast %208 : vector<2x32xf32> to vector<1x2x32xf32>
    tpu.vector_store %arg5[%239, %c0_108, %c0_109], %242 {strides = array<i32>} : memref<8x2x32xf32, #tpu.memory_space<vmem>>, vector<1x2x32xf32>,
    %243 = arith.index_cast %168 : i32 to index
    %c0_110 = arith.constant 0 : index
    %c0_111 = arith.constant 0 : index
    %244 = vector.load %arg6[%243, %c0_110, %c0_111] : memref<8x2x32xf32, #tpu.memory_space<vmem>>, vector<1x2x32xf32>
    %245 = vector.shape_cast %244 : vector<1x2x32xf32> to vector<2x32xf32>
    %246 = vector.shape_cast %234 : vector<2x32xf32> to vector<1x2x32xf32>
    tpu.vector_store %arg6[%243, %c0_110, %c0_111], %246 {strides = array<i32>} : memref<8x2x32xf32, #tpu.memory_space<vmem>>, vector<1x2x32xf32>,
    %c3_i32 = arith.constant 3 : i32
    %c7_i32_112 = arith.constant 7 : i32
    %247 = arith.subi %c7_i32_112, %c3_i32 : i32
    %248 = arith.index_cast %c3_i32 : i32 to index
    %c0_113 = arith.constant 0 : index
    %c0_114 = arith.constant 0 : index
    %249 = vector.load %arg1[%248, %c0_113, %c0_114] : memref<8x2x128xf32, #tpu.memory_space<vmem>>, vector<1x2x128xf32>
    %250 = vector.shape_cast %249 : vector<1x2x128xf32> to vector<2x128xf32>
    %c0_115 = arith.constant 0 : index
    %c0_116 = arith.constant 0 : index
    %251 = vector.load %arg7[%c0_115, %c0_116] : memref<2x32xf32, #tpu.memory_space<vmem>>, vector<2x32xf32>
    %252 = arith.truncf %251 : vector<2x32xf32> to vector<2x32xbf16>
    %cst_117 = arith.constant dense<0.000000e+00> : vector<2x128xf32>
    %253 = tpu.matmul %252, %8, %cst_117 {dimension_numbers = #tpu.dot_dimension_numbers<[1], [0], [0], [1], [0, 0, 1, 1], [], []>} : vector<2x32xbf16>, vector<32x128xbf16>, vector<2x128xf32> -> vector<2x128xf32>
    %254 = arith.addf %250, %253 : vector<2x128xf32>
    %255 = arith.index_cast %247 : i32 to index
    %c0_118 = arith.constant 0 : index
    %c0_119 = arith.constant 0 : index
    %256 = vector.load %arg2[%255, %c0_118, %c0_119] : memref<8x2x128xf32, #tpu.memory_space<vmem>>, vector<1x2x128xf32>
    %257 = vector.shape_cast %256 : vector<1x2x128xf32> to vector<2x128xf32>
    %c0_120 = arith.constant 0 : index
    %c0_121 = arith.constant 0 : index
    %258 = vector.load %arg9[%c0_120, %c0_121] : memref<2x32xf32, #tpu.memory_space<vmem>>, vector<2x32xf32>
    %259 = arith.truncf %258 : vector<2x32xf32> to vector<2x32xbf16>
    %cst_122 = arith.constant dense<0.000000e+00> : vector<2x128xf32>
    %260 = tpu.matmul %259, %9, %cst_122 {dimension_numbers = #tpu.dot_dimension_numbers<[1], [0], [0], [1], [0, 0, 1, 1], [], []>} : vector<2x32xbf16>, vector<32x128xbf16>, vector<2x128xf32> -> vector<2x128xf32>
    %261 = arith.addf %257, %260 : vector<2x128xf32>
    %c0_123 = arith.constant 0 : index
    %c0_124 = arith.constant 0 : index
    %262 = vector.load %arg8[%c0_123, %c0_124] : memref<2x32xf32, #tpu.memory_space<vmem>>, vector<2x32xf32>
    %263 = vector.extract_strided_slice %254 {offsets = [0, 0], sizes = [2, 32], strides = [1, 1]} : vector<2x128xf32> to vector<2x32xf32>
    %264 = arith.negf %263 : vector<2x32xf32>
    %265 = math.exp %264 : vector<2x32xf32>
    %cst_125 = arith.constant 1.000000e+00 : f32
    %266 = vector.broadcast %cst_125 : f32 to vector<2x32xf32>
    %267 = arith.addf %266, %265 : vector<2x32xf32>
    %268 = arith.divf %266, %267 : vector<2x32xf32>
    %269 = vector.extract_strided_slice %254 {offsets = [0, 32], sizes = [2, 32], strides = [1, 1]} : vector<2x128xf32> to vector<2x32xf32>
    %270 = arith.negf %269 : vector<2x32xf32>
    %271 = math.exp %270 : vector<2x32xf32>
    %cst_126 = arith.constant 1.000000e+00 : f32
    %272 = vector.broadcast %cst_126 : f32 to vector<2x32xf32>
    %273 = arith.addf %272, %271 : vector<2x32xf32>
    %274 = arith.divf %272, %273 : vector<2x32xf32>
    %275 = vector.extract_strided_slice %254 {offsets = [0, 64], sizes = [2, 32], strides = [1, 1]} : vector<2x128xf32> to vector<2x32xf32>
    %276 = math.tanh %275 : vector<2x32xf32>
    %277 = vector.extract_strided_slice %254 {offsets = [0, 96], sizes = [2, 32], strides = [1, 1]} : vector<2x128xf32> to vector<2x32xf32>
    %278 = arith.negf %277 : vector<2x32xf32>
    %279 = math.exp %278 : vector<2x32xf32>
    %cst_127 = arith.constant 1.000000e+00 : f32
    %280 = vector.broadcast %cst_127 : f32 to vector<2x32xf32>
    %281 = arith.addf %280, %279 : vector<2x32xf32>
    %282 = arith.divf %280, %281 : vector<2x32xf32>
    %283 = arith.mulf %274, %262 : vector<2x32xf32>
    %284 = arith.mulf %268, %276 : vector<2x32xf32>
    %285 = arith.addf %283, %284 : vector<2x32xf32>
    %286 = math.tanh %285 : vector<2x32xf32>
    %287 = arith.mulf %282, %286 : vector<2x32xf32>
    %c0_128 = arith.constant 0 : index
    %c0_129 = arith.constant 0 : index
    %288 = vector.load %arg10[%c0_128, %c0_129] : memref<2x32xf32, #tpu.memory_space<vmem>>, vector<2x32xf32>
    %289 = vector.extract_strided_slice %261 {offsets = [0, 0], sizes = [2, 32], strides = [1, 1]} : vector<2x128xf32> to vector<2x32xf32>
    %290 = arith.negf %289 : vector<2x32xf32>
    %291 = math.exp %290 : vector<2x32xf32>
    %cst_130 = arith.constant 1.000000e+00 : f32
    %292 = vector.broadcast %cst_130 : f32 to vector<2x32xf32>
    %293 = arith.addf %292, %291 : vector<2x32xf32>
    %294 = arith.divf %292, %293 : vector<2x32xf32>
    %295 = vector.extract_strided_slice %261 {offsets = [0, 32], sizes = [2, 32], strides = [1, 1]} : vector<2x128xf32> to vector<2x32xf32>
    %296 = arith.negf %295 : vector<2x32xf32>
    %297 = math.exp %296 : vector<2x32xf32>
    %cst_131 = arith.constant 1.000000e+00 : f32
    %298 = vector.broadcast %cst_131 : f32 to vector<2x32xf32>
    %299 = arith.addf %298, %297 : vector<2x32xf32>
    %300 = arith.divf %298, %299 : vector<2x32xf32>
    %301 = vector.extract_strided_slice %261 {offsets = [0, 64], sizes = [2, 32], strides = [1, 1]} : vector<2x128xf32> to vector<2x32xf32>
    %302 = math.tanh %301 : vector<2x32xf32>
    %303 = vector.extract_strided_slice %261 {offsets = [0, 96], sizes = [2, 32], strides = [1, 1]} : vector<2x128xf32> to vector<2x32xf32>
    %304 = arith.negf %303 : vector<2x32xf32>
    %305 = math.exp %304 : vector<2x32xf32>
    %cst_132 = arith.constant 1.000000e+00 : f32
    %306 = vector.broadcast %cst_132 : f32 to vector<2x32xf32>
    %307 = arith.addf %306, %305 : vector<2x32xf32>
    %308 = arith.divf %306, %307 : vector<2x32xf32>
    %309 = arith.mulf %300, %288 : vector<2x32xf32>
    %310 = arith.mulf %294, %302 : vector<2x32xf32>
    %311 = arith.addf %309, %310 : vector<2x32xf32>
    %312 = math.tanh %311 : vector<2x32xf32>
    %313 = arith.mulf %308, %312 : vector<2x32xf32>
    %c0_133 = arith.constant 0 : index
    %c0_134 = arith.constant 0 : index
    %314 = vector.load %arg7[%c0_133, %c0_134] : memref<2x32xf32, #tpu.memory_space<vmem>>, vector<2x32xf32>
    tpu.vector_store %arg7[%c0_133, %c0_134], %287 {strides = array<i32>} : memref<2x32xf32, #tpu.memory_space<vmem>>, vector<2x32xf32>,
    %c0_135 = arith.constant 0 : index
    %c0_136 = arith.constant 0 : index
    %315 = vector.load %arg8[%c0_135, %c0_136] : memref<2x32xf32, #tpu.memory_space<vmem>>, vector<2x32xf32>
    tpu.vector_store %arg8[%c0_135, %c0_136], %285 {strides = array<i32>} : memref<2x32xf32, #tpu.memory_space<vmem>>, vector<2x32xf32>,
    %c0_137 = arith.constant 0 : index
    %c0_138 = arith.constant 0 : index
    %316 = vector.load %arg9[%c0_137, %c0_138] : memref<2x32xf32, #tpu.memory_space<vmem>>, vector<2x32xf32>
    tpu.vector_store %arg9[%c0_137, %c0_138], %313 {strides = array<i32>} : memref<2x32xf32, #tpu.memory_space<vmem>>, vector<2x32xf32>,
    %c0_139 = arith.constant 0 : index
    %c0_140 = arith.constant 0 : index
    %317 = vector.load %arg10[%c0_139, %c0_140] : memref<2x32xf32, #tpu.memory_space<vmem>>, vector<2x32xf32>
    tpu.vector_store %arg10[%c0_139, %c0_140], %311 {strides = array<i32>} : memref<2x32xf32, #tpu.memory_space<vmem>>, vector<2x32xf32>,
    %318 = arith.index_cast %c3_i32 : i32 to index
    %c0_141 = arith.constant 0 : index
    %c0_142 = arith.constant 0 : index
    %319 = vector.load %arg5[%318, %c0_141, %c0_142] : memref<8x2x32xf32, #tpu.memory_space<vmem>>, vector<1x2x32xf32>
    %320 = vector.shape_cast %319 : vector<1x2x32xf32> to vector<2x32xf32>
    %321 = vector.shape_cast %287 : vector<2x32xf32> to vector<1x2x32xf32>
    tpu.vector_store %arg5[%318, %c0_141, %c0_142], %321 {strides = array<i32>} : memref<8x2x32xf32, #tpu.memory_space<vmem>>, vector<1x2x32xf32>,
    %322 = arith.index_cast %247 : i32 to index
    %c0_143 = arith.constant 0 : index
    %c0_144 = arith.constant 0 : index
    %323 = vector.load %arg6[%322, %c0_143, %c0_144] : memref<8x2x32xf32, #tpu.memory_space<vmem>>, vector<1x2x32xf32>
    %324 = vector.shape_cast %323 : vector<1x2x32xf32> to vector<2x32xf32>
    %325 = vector.shape_cast %313 : vector<2x32xf32> to vector<1x2x32xf32>
    tpu.vector_store %arg6[%322, %c0_143, %c0_144], %325 {strides = array<i32>} : memref<8x2x32xf32, #tpu.memory_space<vmem>>, vector<1x2x32xf32>,
    %c4_i32 = arith.constant 4 : i32
    %c7_i32_145 = arith.constant 7 : i32
    %326 = arith.subi %c7_i32_145, %c4_i32 : i32
    %327 = arith.index_cast %c4_i32 : i32 to index
    %c0_146 = arith.constant 0 : index
    %c0_147 = arith.constant 0 : index
    %328 = vector.load %arg1[%327, %c0_146, %c0_147] : memref<8x2x128xf32, #tpu.memory_space<vmem>>, vector<1x2x128xf32>
    %329 = vector.shape_cast %328 : vector<1x2x128xf32> to vector<2x128xf32>
    %c0_148 = arith.constant 0 : index
    %c0_149 = arith.constant 0 : index
    %330 = vector.load %arg7[%c0_148, %c0_149] : memref<2x32xf32, #tpu.memory_space<vmem>>, vector<2x32xf32>
    %331 = arith.truncf %330 : vector<2x32xf32> to vector<2x32xbf16>
    %cst_150 = arith.constant dense<0.000000e+00> : vector<2x128xf32>
    %332 = tpu.matmul %331, %8, %cst_150 {dimension_numbers = #tpu.dot_dimension_numbers<[1], [0], [0], [1], [0, 0, 1, 1], [], []>} : vector<2x32xbf16>, vector<32x128xbf16>, vector<2x128xf32> -> vector<2x128xf32>
    %333 = arith.addf %329, %332 : vector<2x128xf32>
    %334 = arith.index_cast %326 : i32 to index
    %c0_151 = arith.constant 0 : index
    %c0_152 = arith.constant 0 : index
    %335 = vector.load %arg2[%334, %c0_151, %c0_152] : memref<8x2x128xf32, #tpu.memory_space<vmem>>, vector<1x2x128xf32>
    %336 = vector.shape_cast %335 : vector<1x2x128xf32> to vector<2x128xf32>
    %c0_153 = arith.constant 0 : index
    %c0_154 = arith.constant 0 : index
    %337 = vector.load %arg9[%c0_153, %c0_154] : memref<2x32xf32, #tpu.memory_space<vmem>>, vector<2x32xf32>
    %338 = arith.truncf %337 : vector<2x32xf32> to vector<2x32xbf16>
    %cst_155 = arith.constant dense<0.000000e+00> : vector<2x128xf32>
    %339 = tpu.matmul %338, %9, %cst_155 {dimension_numbers = #tpu.dot_dimension_numbers<[1], [0], [0], [1], [0, 0, 1, 1], [], []>} : vector<2x32xbf16>, vector<32x128xbf16>, vector<2x128xf32> -> vector<2x128xf32>
    %340 = arith.addf %336, %339 : vector<2x128xf32>
    %c0_156 = arith.constant 0 : index
    %c0_157 = arith.constant 0 : index
    %341 = vector.load %arg8[%c0_156, %c0_157] : memref<2x32xf32, #tpu.memory_space<vmem>>, vector<2x32xf32>
    %342 = vector.extract_strided_slice %333 {offsets = [0, 0], sizes = [2, 32], strides = [1, 1]} : vector<2x128xf32> to vector<2x32xf32>
    %343 = arith.negf %342 : vector<2x32xf32>
    %344 = math.exp %343 : vector<2x32xf32>
    %cst_158 = arith.constant 1.000000e+00 : f32
    %345 = vector.broadcast %cst_158 : f32 to vector<2x32xf32>
    %346 = arith.addf %345, %344 : vector<2x32xf32>
    %347 = arith.divf %345, %346 : vector<2x32xf32>
    %348 = vector.extract_strided_slice %333 {offsets = [0, 32], sizes = [2, 32], strides = [1, 1]} : vector<2x128xf32> to vector<2x32xf32>
    %349 = arith.negf %348 : vector<2x32xf32>
    %350 = math.exp %349 : vector<2x32xf32>
    %cst_159 = arith.constant 1.000000e+00 : f32
    %351 = vector.broadcast %cst_159 : f32 to vector<2x32xf32>
    %352 = arith.addf %351, %350 : vector<2x32xf32>
    %353 = arith.divf %351, %352 : vector<2x32xf32>
    %354 = vector.extract_strided_slice %333 {offsets = [0, 64], sizes = [2, 32], strides = [1, 1]} : vector<2x128xf32> to vector<2x32xf32>
    %355 = math.tanh %354 : vector<2x32xf32>
    %356 = vector.extract_strided_slice %333 {offsets = [0, 96], sizes = [2, 32], strides = [1, 1]} : vector<2x128xf32> to vector<2x32xf32>
    %357 = arith.negf %356 : vector<2x32xf32>
    %358 = math.exp %357 : vector<2x32xf32>
    %cst_160 = arith.constant 1.000000e+00 : f32
    %359 = vector.broadcast %cst_160 : f32 to vector<2x32xf32>
    %360 = arith.addf %359, %358 : vector<2x32xf32>
    %361 = arith.divf %359, %360 : vector<2x32xf32>
    %362 = arith.mulf %353, %341 : vector<2x32xf32>
    %363 = arith.mulf %347, %355 : vector<2x32xf32>
    %364 = arith.addf %362, %363 : vector<2x32xf32>
    %365 = math.tanh %364 : vector<2x32xf32>
    %366 = arith.mulf %361, %365 : vector<2x32xf32>
    %c0_161 = arith.constant 0 : index
    %c0_162 = arith.constant 0 : index
    %367 = vector.load %arg10[%c0_161, %c0_162] : memref<2x32xf32, #tpu.memory_space<vmem>>, vector<2x32xf32>
    %368 = vector.extract_strided_slice %340 {offsets = [0, 0], sizes = [2, 32], strides = [1, 1]} : vector<2x128xf32> to vector<2x32xf32>
    %369 = arith.negf %368 : vector<2x32xf32>
    %370 = math.exp %369 : vector<2x32xf32>
    %cst_163 = arith.constant 1.000000e+00 : f32
    %371 = vector.broadcast %cst_163 : f32 to vector<2x32xf32>
    %372 = arith.addf %371, %370 : vector<2x32xf32>
    %373 = arith.divf %371, %372 : vector<2x32xf32>
    %374 = vector.extract_strided_slice %340 {offsets = [0, 32], sizes = [2, 32], strides = [1, 1]} : vector<2x128xf32> to vector<2x32xf32>
    %375 = arith.negf %374 : vector<2x32xf32>
    %376 = math.exp %375 : vector<2x32xf32>
    %cst_164 = arith.constant 1.000000e+00 : f32
    %377 = vector.broadcast %cst_164 : f32 to vector<2x32xf32>
    %378 = arith.addf %377, %376 : vector<2x32xf32>
    %379 = arith.divf %377, %378 : vector<2x32xf32>
    %380 = vector.extract_strided_slice %340 {offsets = [0, 64], sizes = [2, 32], strides = [1, 1]} : vector<2x128xf32> to vector<2x32xf32>
    %381 = math.tanh %380 : vector<2x32xf32>
    %382 = vector.extract_strided_slice %340 {offsets = [0, 96], sizes = [2, 32], strides = [1, 1]} : vector<2x128xf32> to vector<2x32xf32>
    %383 = arith.negf %382 : vector<2x32xf32>
    %384 = math.exp %383 : vector<2x32xf32>
    %cst_165 = arith.constant 1.000000e+00 : f32
    %385 = vector.broadcast %cst_165 : f32 to vector<2x32xf32>
    %386 = arith.addf %385, %384 : vector<2x32xf32>
    %387 = arith.divf %385, %386 : vector<2x32xf32>
    %388 = arith.mulf %379, %367 : vector<2x32xf32>
    %389 = arith.mulf %373, %381 : vector<2x32xf32>
    %390 = arith.addf %388, %389 : vector<2x32xf32>
    %391 = math.tanh %390 : vector<2x32xf32>
    %392 = arith.mulf %387, %391 : vector<2x32xf32>
    %c0_166 = arith.constant 0 : index
    %c0_167 = arith.constant 0 : index
    %393 = vector.load %arg7[%c0_166, %c0_167] : memref<2x32xf32, #tpu.memory_space<vmem>>, vector<2x32xf32>
    tpu.vector_store %arg7[%c0_166, %c0_167], %366 {strides = array<i32>} : memref<2x32xf32, #tpu.memory_space<vmem>>, vector<2x32xf32>,
    %c0_168 = arith.constant 0 : index
    %c0_169 = arith.constant 0 : index
    %394 = vector.load %arg8[%c0_168, %c0_169] : memref<2x32xf32, #tpu.memory_space<vmem>>, vector<2x32xf32>
    tpu.vector_store %arg8[%c0_168, %c0_169], %364 {strides = array<i32>} : memref<2x32xf32, #tpu.memory_space<vmem>>, vector<2x32xf32>,
    %c0_170 = arith.constant 0 : index
    %c0_171 = arith.constant 0 : index
    %395 = vector.load %arg9[%c0_170, %c0_171] : memref<2x32xf32, #tpu.memory_space<vmem>>, vector<2x32xf32>
    tpu.vector_store %arg9[%c0_170, %c0_171], %392 {strides = array<i32>} : memref<2x32xf32, #tpu.memory_space<vmem>>, vector<2x32xf32>,
    %c0_172 = arith.constant 0 : index
    %c0_173 = arith.constant 0 : index
    %396 = vector.load %arg10[%c0_172, %c0_173] : memref<2x32xf32, #tpu.memory_space<vmem>>, vector<2x32xf32>
    tpu.vector_store %arg10[%c0_172, %c0_173], %390 {strides = array<i32>} : memref<2x32xf32, #tpu.memory_space<vmem>>, vector<2x32xf32>,
    %397 = arith.index_cast %c4_i32 : i32 to index
    %c0_174 = arith.constant 0 : index
    %c0_175 = arith.constant 0 : index
    %398 = vector.load %arg5[%397, %c0_174, %c0_175] : memref<8x2x32xf32, #tpu.memory_space<vmem>>, vector<1x2x32xf32>
    %399 = vector.shape_cast %398 : vector<1x2x32xf32> to vector<2x32xf32>
    %400 = vector.shape_cast %366 : vector<2x32xf32> to vector<1x2x32xf32>
    tpu.vector_store %arg5[%397, %c0_174, %c0_175], %400 {strides = array<i32>} : memref<8x2x32xf32, #tpu.memory_space<vmem>>, vector<1x2x32xf32>,
    %401 = arith.index_cast %326 : i32 to index
    %c0_176 = arith.constant 0 : index
    %c0_177 = arith.constant 0 : index
    %402 = vector.load %arg6[%401, %c0_176, %c0_177] : memref<8x2x32xf32, #tpu.memory_space<vmem>>, vector<1x2x32xf32>
    %403 = vector.shape_cast %402 : vector<1x2x32xf32> to vector<2x32xf32>
    %404 = vector.shape_cast %392 : vector<2x32xf32> to vector<1x2x32xf32>
    tpu.vector_store %arg6[%401, %c0_176, %c0_177], %404 {strides = array<i32>} : memref<8x2x32xf32, #tpu.memory_space<vmem>>, vector<1x2x32xf32>,
    %c5_i32 = arith.constant 5 : i32
    %c7_i32_178 = arith.constant 7 : i32
    %405 = arith.subi %c7_i32_178, %c5_i32 : i32
    %406 = arith.index_cast %c5_i32 : i32 to index
    %c0_179 = arith.constant 0 : index
    %c0_180 = arith.constant 0 : index
    %407 = vector.load %arg1[%406, %c0_179, %c0_180] : memref<8x2x128xf32, #tpu.memory_space<vmem>>, vector<1x2x128xf32>
    %408 = vector.shape_cast %407 : vector<1x2x128xf32> to vector<2x128xf32>
    %c0_181 = arith.constant 0 : index
    %c0_182 = arith.constant 0 : index
    %409 = vector.load %arg7[%c0_181, %c0_182] : memref<2x32xf32, #tpu.memory_space<vmem>>, vector<2x32xf32>
    %410 = arith.truncf %409 : vector<2x32xf32> to vector<2x32xbf16>
    %cst_183 = arith.constant dense<0.000000e+00> : vector<2x128xf32>
    %411 = tpu.matmul %410, %8, %cst_183 {dimension_numbers = #tpu.dot_dimension_numbers<[1], [0], [0], [1], [0, 0, 1, 1], [], []>} : vector<2x32xbf16>, vector<32x128xbf16>, vector<2x128xf32> -> vector<2x128xf32>
    %412 = arith.addf %408, %411 : vector<2x128xf32>
    %413 = arith.index_cast %405 : i32 to index
    %c0_184 = arith.constant 0 : index
    %c0_185 = arith.constant 0 : index
    %414 = vector.load %arg2[%413, %c0_184, %c0_185] : memref<8x2x128xf32, #tpu.memory_space<vmem>>, vector<1x2x128xf32>
    %415 = vector.shape_cast %414 : vector<1x2x128xf32> to vector<2x128xf32>
    %c0_186 = arith.constant 0 : index
    %c0_187 = arith.constant 0 : index
    %416 = vector.load %arg9[%c0_186, %c0_187] : memref<2x32xf32, #tpu.memory_space<vmem>>, vector<2x32xf32>
    %417 = arith.truncf %416 : vector<2x32xf32> to vector<2x32xbf16>
    %cst_188 = arith.constant dense<0.000000e+00> : vector<2x128xf32>
    %418 = tpu.matmul %417, %9, %cst_188 {dimension_numbers = #tpu.dot_dimension_numbers<[1], [0], [0], [1], [0, 0, 1, 1], [], []>} : vector<2x32xbf16>, vector<32x128xbf16>, vector<2x128xf32> -> vector<2x128xf32>
    %419 = arith.addf %415, %418 : vector<2x128xf32>
    %c0_189 = arith.constant 0 : index
    %c0_190 = arith.constant 0 : index
    %420 = vector.load %arg8[%c0_189, %c0_190] : memref<2x32xf32, #tpu.memory_space<vmem>>, vector<2x32xf32>
    %421 = vector.extract_strided_slice %412 {offsets = [0, 0], sizes = [2, 32], strides = [1, 1]} : vector<2x128xf32> to vector<2x32xf32>
    %422 = arith.negf %421 : vector<2x32xf32>
    %423 = math.exp %422 : vector<2x32xf32>
    %cst_191 = arith.constant 1.000000e+00 : f32
    %424 = vector.broadcast %cst_191 : f32 to vector<2x32xf32>
    %425 = arith.addf %424, %423 : vector<2x32xf32>
    %426 = arith.divf %424, %425 : vector<2x32xf32>
    %427 = vector.extract_strided_slice %412 {offsets = [0, 32], sizes = [2, 32], strides = [1, 1]} : vector<2x128xf32> to vector<2x32xf32>
    %428 = arith.negf %427 : vector<2x32xf32>
    %429 = math.exp %428 : vector<2x32xf32>
    %cst_192 = arith.constant 1.000000e+00 : f32
    %430 = vector.broadcast %cst_192 : f32 to vector<2x32xf32>
    %431 = arith.addf %430, %429 : vector<2x32xf32>
    %432 = arith.divf %430, %431 : vector<2x32xf32>
    %433 = vector.extract_strided_slice %412 {offsets = [0, 64], sizes = [2, 32], strides = [1, 1]} : vector<2x128xf32> to vector<2x32xf32>
    %434 = math.tanh %433 : vector<2x32xf32>
    %435 = vector.extract_strided_slice %412 {offsets = [0, 96], sizes = [2, 32], strides = [1, 1]} : vector<2x128xf32> to vector<2x32xf32>
    %436 = arith.negf %435 : vector<2x32xf32>
    %437 = math.exp %436 : vector<2x32xf32>
    %cst_193 = arith.constant 1.000000e+00 : f32
    %438 = vector.broadcast %cst_193 : f32 to vector<2x32xf32>
    %439 = arith.addf %438, %437 : vector<2x32xf32>
    %440 = arith.divf %438, %439 : vector<2x32xf32>
    %441 = arith.mulf %432, %420 : vector<2x32xf32>
    %442 = arith.mulf %426, %434 : vector<2x32xf32>
    %443 = arith.addf %441, %442 : vector<2x32xf32>
    %444 = math.tanh %443 : vector<2x32xf32>
    %445 = arith.mulf %440, %444 : vector<2x32xf32>
    %c0_194 = arith.constant 0 : index
    %c0_195 = arith.constant 0 : index
    %446 = vector.load %arg10[%c0_194, %c0_195] : memref<2x32xf32, #tpu.memory_space<vmem>>, vector<2x32xf32>
    %447 = vector.extract_strided_slice %419 {offsets = [0, 0], sizes = [2, 32], strides = [1, 1]} : vector<2x128xf32> to vector<2x32xf32>
    %448 = arith.negf %447 : vector<2x32xf32>
    %449 = math.exp %448 : vector<2x32xf32>
    %cst_196 = arith.constant 1.000000e+00 : f32
    %450 = vector.broadcast %cst_196 : f32 to vector<2x32xf32>
    %451 = arith.addf %450, %449 : vector<2x32xf32>
    %452 = arith.divf %450, %451 : vector<2x32xf32>
    %453 = vector.extract_strided_slice %419 {offsets = [0, 32], sizes = [2, 32], strides = [1, 1]} : vector<2x128xf32> to vector<2x32xf32>
    %454 = arith.negf %453 : vector<2x32xf32>
    %455 = math.exp %454 : vector<2x32xf32>
    %cst_197 = arith.constant 1.000000e+00 : f32
    %456 = vector.broadcast %cst_197 : f32 to vector<2x32xf32>
    %457 = arith.addf %456, %455 : vector<2x32xf32>
    %458 = arith.divf %456, %457 : vector<2x32xf32>
    %459 = vector.extract_strided_slice %419 {offsets = [0, 64], sizes = [2, 32], strides = [1, 1]} : vector<2x128xf32> to vector<2x32xf32>
    %460 = math.tanh %459 : vector<2x32xf32>
    %461 = vector.extract_strided_slice %419 {offsets = [0, 96], sizes = [2, 32], strides = [1, 1]} : vector<2x128xf32> to vector<2x32xf32>
    %462 = arith.negf %461 : vector<2x32xf32>
    %463 = math.exp %462 : vector<2x32xf32>
    %cst_198 = arith.constant 1.000000e+00 : f32
    %464 = vector.broadcast %cst_198 : f32 to vector<2x32xf32>
    %465 = arith.addf %464, %463 : vector<2x32xf32>
    %466 = arith.divf %464, %465 : vector<2x32xf32>
    %467 = arith.mulf %458, %446 : vector<2x32xf32>
    %468 = arith.mulf %452, %460 : vector<2x32xf32>
    %469 = arith.addf %467, %468 : vector<2x32xf32>
    %470 = math.tanh %469 : vector<2x32xf32>
    %471 = arith.mulf %466, %470 : vector<2x32xf32>
    %c0_199 = arith.constant 0 : index
    %c0_200 = arith.constant 0 : index
    %472 = vector.load %arg7[%c0_199, %c0_200] : memref<2x32xf32, #tpu.memory_space<vmem>>, vector<2x32xf32>
    tpu.vector_store %arg7[%c0_199, %c0_200], %445 {strides = array<i32>} : memref<2x32xf32, #tpu.memory_space<vmem>>, vector<2x32xf32>,
    %c0_201 = arith.constant 0 : index
    %c0_202 = arith.constant 0 : index
    %473 = vector.load %arg8[%c0_201, %c0_202] : memref<2x32xf32, #tpu.memory_space<vmem>>, vector<2x32xf32>
    tpu.vector_store %arg8[%c0_201, %c0_202], %443 {strides = array<i32>} : memref<2x32xf32, #tpu.memory_space<vmem>>, vector<2x32xf32>,
    %c0_203 = arith.constant 0 : index
    %c0_204 = arith.constant 0 : index
    %474 = vector.load %arg9[%c0_203, %c0_204] : memref<2x32xf32, #tpu.memory_space<vmem>>, vector<2x32xf32>
    tpu.vector_store %arg9[%c0_203, %c0_204], %471 {strides = array<i32>} : memref<2x32xf32, #tpu.memory_space<vmem>>, vector<2x32xf32>,
    %c0_205 = arith.constant 0 : index
    %c0_206 = arith.constant 0 : index
    %475 = vector.load %arg10[%c0_205, %c0_206] : memref<2x32xf32, #tpu.memory_space<vmem>>, vector<2x32xf32>
    tpu.vector_store %arg10[%c0_205, %c0_206], %469 {strides = array<i32>} : memref<2x32xf32, #tpu.memory_space<vmem>>, vector<2x32xf32>,
    %476 = arith.index_cast %c5_i32 : i32 to index
    %c0_207 = arith.constant 0 : index
    %c0_208 = arith.constant 0 : index
    %477 = vector.load %arg5[%476, %c0_207, %c0_208] : memref<8x2x32xf32, #tpu.memory_space<vmem>>, vector<1x2x32xf32>
    %478 = vector.shape_cast %477 : vector<1x2x32xf32> to vector<2x32xf32>
    %479 = vector.shape_cast %445 : vector<2x32xf32> to vector<1x2x32xf32>
    tpu.vector_store %arg5[%476, %c0_207, %c0_208], %479 {strides = array<i32>} : memref<8x2x32xf32, #tpu.memory_space<vmem>>, vector<1x2x32xf32>,
    %480 = arith.index_cast %405 : i32 to index
    %c0_209 = arith.constant 0 : index
    %c0_210 = arith.constant 0 : index
    %481 = vector.load %arg6[%480, %c0_209, %c0_210] : memref<8x2x32xf32, #tpu.memory_space<vmem>>, vector<1x2x32xf32>
    %482 = vector.shape_cast %481 : vector<1x2x32xf32> to vector<2x32xf32>
    %483 = vector.shape_cast %471 : vector<2x32xf32> to vector<1x2x32xf32>
    tpu.vector_store %arg6[%480, %c0_209, %c0_210], %483 {strides = array<i32>} : memref<8x2x32xf32, #tpu.memory_space<vmem>>, vector<1x2x32xf32>,
    %c6_i32 = arith.constant 6 : i32
    %c7_i32_211 = arith.constant 7 : i32
    %484 = arith.subi %c7_i32_211, %c6_i32 : i32
    %485 = arith.index_cast %c6_i32 : i32 to index
    %c0_212 = arith.constant 0 : index
    %c0_213 = arith.constant 0 : index
    %486 = vector.load %arg1[%485, %c0_212, %c0_213] : memref<8x2x128xf32, #tpu.memory_space<vmem>>, vector<1x2x128xf32>
    %487 = vector.shape_cast %486 : vector<1x2x128xf32> to vector<2x128xf32>
    %c0_214 = arith.constant 0 : index
    %c0_215 = arith.constant 0 : index
    %488 = vector.load %arg7[%c0_214, %c0_215] : memref<2x32xf32, #tpu.memory_space<vmem>>, vector<2x32xf32>
    %489 = arith.truncf %488 : vector<2x32xf32> to vector<2x32xbf16>
    %cst_216 = arith.constant dense<0.000000e+00> : vector<2x128xf32>
    %490 = tpu.matmul %489, %8, %cst_216 {dimension_numbers = #tpu.dot_dimension_numbers<[1], [0], [0], [1], [0, 0, 1, 1], [], []>} : vector<2x32xbf16>, vector<32x128xbf16>, vector<2x128xf32> -> vector<2x128xf32>
    %491 = arith.addf %487, %490 : vector<2x128xf32>
    %492 = arith.index_cast %484 : i32 to index
    %c0_217 = arith.constant 0 : index
    %c0_218 = arith.constant 0 : index
    %493 = vector.load %arg2[%492, %c0_217, %c0_218] : memref<8x2x128xf32, #tpu.memory_space<vmem>>, vector<1x2x128xf32>
    %494 = vector.shape_cast %493 : vector<1x2x128xf32> to vector<2x128xf32>
    %c0_219 = arith.constant 0 : index
    %c0_220 = arith.constant 0 : index
    %495 = vector.load %arg9[%c0_219, %c0_220] : memref<2x32xf32, #tpu.memory_space<vmem>>, vector<2x32xf32>
    %496 = arith.truncf %495 : vector<2x32xf32> to vector<2x32xbf16>
    %cst_221 = arith.constant dense<0.000000e+00> : vector<2x128xf32>
    %497 = tpu.matmul %496, %9, %cst_221 {dimension_numbers = #tpu.dot_dimension_numbers<[1], [0], [0], [1], [0, 0, 1, 1], [], []>} : vector<2x32xbf16>, vector<32x128xbf16>, vector<2x128xf32> -> vector<2x128xf32>
    %498 = arith.addf %494, %497 : vector<2x128xf32>
    %c0_222 = arith.constant 0 : index
    %c0_223 = arith.constant 0 : index
    %499 = vector.load %arg8[%c0_222, %c0_223] : memref<2x32xf32, #tpu.memory_space<vmem>>, vector<2x32xf32>
    %500 = vector.extract_strided_slice %491 {offsets = [0, 0], sizes = [2, 32], strides = [1, 1]} : vector<2x128xf32> to vector<2x32xf32>
    %501 = arith.negf %500 : vector<2x32xf32>
    %502 = math.exp %501 : vector<2x32xf32>
    %cst_224 = arith.constant 1.000000e+00 : f32
    %503 = vector.broadcast %cst_224 : f32 to vector<2x32xf32>
    %504 = arith.addf %503, %502 : vector<2x32xf32>
    %505 = arith.divf %503, %504 : vector<2x32xf32>
    %506 = vector.extract_strided_slice %491 {offsets = [0, 32], sizes = [2, 32], strides = [1, 1]} : vector<2x128xf32> to vector<2x32xf32>
    %507 = arith.negf %506 : vector<2x32xf32>
    %508 = math.exp %507 : vector<2x32xf32>
    %cst_225 = arith.constant 1.000000e+00 : f32
    %509 = vector.broadcast %cst_225 : f32 to vector<2x32xf32>
    %510 = arith.addf %509, %508 : vector<2x32xf32>
    %511 = arith.divf %509, %510 : vector<2x32xf32>
    %512 = vector.extract_strided_slice %491 {offsets = [0, 64], sizes = [2, 32], strides = [1, 1]} : vector<2x128xf32> to vector<2x32xf32>
    %513 = math.tanh %512 : vector<2x32xf32>
    %514 = vector.extract_strided_slice %491 {offsets = [0, 96], sizes = [2, 32], strides = [1, 1]} : vector<2x128xf32> to vector<2x32xf32>
    %515 = arith.negf %514 : vector<2x32xf32>
    %516 = math.exp %515 : vector<2x32xf32>
    %cst_226 = arith.constant 1.000000e+00 : f32
    %517 = vector.broadcast %cst_226 : f32 to vector<2x32xf32>
    %518 = arith.addf %517, %516 : vector<2x32xf32>
    %519 = arith.divf %517, %518 : vector<2x32xf32>
    %520 = arith.mulf %511, %499 : vector<2x32xf32>
    %521 = arith.mulf %505, %513 : vector<2x32xf32>
    %522 = arith.addf %520, %521 : vector<2x32xf32>
    %523 = math.tanh %522 : vector<2x32xf32>
    %524 = arith.mulf %519, %523 : vector<2x32xf32>
    %c0_227 = arith.constant 0 : index
    %c0_228 = arith.constant 0 : index
    %525 = vector.load %arg10[%c0_227, %c0_228] : memref<2x32xf32, #tpu.memory_space<vmem>>, vector<2x32xf32>
    %526 = vector.extract_strided_slice %498 {offsets = [0, 0], sizes = [2, 32], strides = [1, 1]} : vector<2x128xf32> to vector<2x32xf32>
    %527 = arith.negf %526 : vector<2x32xf32>
    %528 = math.exp %527 : vector<2x32xf32>
    %cst_229 = arith.constant 1.000000e+00 : f32
    %529 = vector.broadcast %cst_229 : f32 to vector<2x32xf32>
    %530 = arith.addf %529, %528 : vector<2x32xf32>
    %531 = arith.divf %529, %530 : vector<2x32xf32>
    %532 = vector.extract_strided_slice %498 {offsets = [0, 32], sizes = [2, 32], strides = [1, 1]} : vector<2x128xf32> to vector<2x32xf32>
    %533 = arith.negf %532 : vector<2x32xf32>
    %534 = math.exp %533 : vector<2x32xf32>
    %cst_230 = arith.constant 1.000000e+00 : f32
    %535 = vector.broadcast %cst_230 : f32 to vector<2x32xf32>
    %536 = arith.addf %535, %534 : vector<2x32xf32>
    %537 = arith.divf %535, %536 : vector<2x32xf32>
    %538 = vector.extract_strided_slice %498 {offsets = [0, 64], sizes = [2, 32], strides = [1, 1]} : vector<2x128xf32> to vector<2x32xf32>
    %539 = math.tanh %538 : vector<2x32xf32>
    %540 = vector.extract_strided_slice %498 {offsets = [0, 96], sizes = [2, 32], strides = [1, 1]} : vector<2x128xf32> to vector<2x32xf32>
    %541 = arith.negf %540 : vector<2x32xf32>
    %542 = math.exp %541 : vector<2x32xf32>
    %cst_231 = arith.constant 1.000000e+00 : f32
    %543 = vector.broadcast %cst_231 : f32 to vector<2x32xf32>
    %544 = arith.addf %543, %542 : vector<2x32xf32>
    %545 = arith.divf %543, %544 : vector<2x32xf32>
    %546 = arith.mulf %537, %525 : vector<2x32xf32>
    %547 = arith.mulf %531, %539 : vector<2x32xf32>
    %548 = arith.addf %546, %547 : vector<2x32xf32>
    %549 = math.tanh %548 : vector<2x32xf32>
    %550 = arith.mulf %545, %549 : vector<2x32xf32>
    %c0_232 = arith.constant 0 : index
    %c0_233 = arith.constant 0 : index
    %551 = vector.load %arg7[%c0_232, %c0_233] : memref<2x32xf32, #tpu.memory_space<vmem>>, vector<2x32xf32>
    tpu.vector_store %arg7[%c0_232, %c0_233], %524 {strides = array<i32>} : memref<2x32xf32, #tpu.memory_space<vmem>>, vector<2x32xf32>,
    %c0_234 = arith.constant 0 : index
    %c0_235 = arith.constant 0 : index
    %552 = vector.load %arg8[%c0_234, %c0_235] : memref<2x32xf32, #tpu.memory_space<vmem>>, vector<2x32xf32>
    tpu.vector_store %arg8[%c0_234, %c0_235], %522 {strides = array<i32>} : memref<2x32xf32, #tpu.memory_space<vmem>>, vector<2x32xf32>,
    %c0_236 = arith.constant 0 : index
    %c0_237 = arith.constant 0 : index
    %553 = vector.load %arg9[%c0_236, %c0_237] : memref<2x32xf32, #tpu.memory_space<vmem>>, vector<2x32xf32>
    tpu.vector_store %arg9[%c0_236, %c0_237], %550 {strides = array<i32>} : memref<2x32xf32, #tpu.memory_space<vmem>>, vector<2x32xf32>,
    %c0_238 = arith.constant 0 : index
    %c0_239 = arith.constant 0 : index
    %554 = vector.load %arg10[%c0_238, %c0_239] : memref<2x32xf32, #tpu.memory_space<vmem>>, vector<2x32xf32>
    tpu.vector_store %arg10[%c0_238, %c0_239], %548 {strides = array<i32>} : memref<2x32xf32, #tpu.memory_space<vmem>>, vector<2x32xf32>,
    %555 = arith.index_cast %c6_i32 : i32 to index
    %c0_240 = arith.constant 0 : index
    %c0_241 = arith.constant 0 : index
    %556 = vector.load %arg5[%555, %c0_240, %c0_241] : memref<8x2x32xf32, #tpu.memory_space<vmem>>, vector<1x2x32xf32>
    %557 = vector.shape_cast %556 : vector<1x2x32xf32> to vector<2x32xf32>
    %558 = vector.shape_cast %524 : vector<2x32xf32> to vector<1x2x32xf32>
    tpu.vector_store %arg5[%555, %c0_240, %c0_241], %558 {strides = array<i32>} : memref<8x2x32xf32, #tpu.memory_space<vmem>>, vector<1x2x32xf32>,
    %559 = arith.index_cast %484 : i32 to index
    %c0_242 = arith.constant 0 : index
    %c0_243 = arith.constant 0 : index
    %560 = vector.load %arg6[%559, %c0_242, %c0_243] : memref<8x2x32xf32, #tpu.memory_space<vmem>>, vector<1x2x32xf32>
    %561 = vector.shape_cast %560 : vector<1x2x32xf32> to vector<2x32xf32>
    %562 = vector.shape_cast %550 : vector<2x32xf32> to vector<1x2x32xf32>
    tpu.vector_store %arg6[%559, %c0_242, %c0_243], %562 {strides = array<i32>} : memref<8x2x32xf32, #tpu.memory_space<vmem>>, vector<1x2x32xf32>,
    %c7_i32_244 = arith.constant 7 : i32
    %c7_i32_245 = arith.constant 7 : i32
    %563 = arith.subi %c7_i32_245, %c7_i32_244 : i32
    %564 = arith.index_cast %c7_i32_244 : i32 to index
    %c0_246 = arith.constant 0 : index
    %c0_247 = arith.constant 0 : index
    %565 = vector.load %arg1[%564, %c0_246, %c0_247] : memref<8x2x128xf32, #tpu.memory_space<vmem>>, vector<1x2x128xf32>
    %566 = vector.shape_cast %565 : vector<1x2x128xf32> to vector<2x128xf32>
    %c0_248 = arith.constant 0 : index
    %c0_249 = arith.constant 0 : index
    %567 = vector.load %arg7[%c0_248, %c0_249] : memref<2x32xf32, #tpu.memory_space<vmem>>, vector<2x32xf32>
    %568 = arith.truncf %567 : vector<2x32xf32> to vector<2x32xbf16>
    %cst_250 = arith.constant dense<0.000000e+00> : vector<2x128xf32>
    %569 = tpu.matmul %568, %8, %cst_250 {dimension_numbers = #tpu.dot_dimension_numbers<[1], [0], [0], [1], [0, 0, 1, 1], [], []>} : vector<2x32xbf16>, vector<32x128xbf16>, vector<2x128xf32> -> vector<2x128xf32>
    %570 = arith.addf %566, %569 : vector<2x128xf32>
    %571 = arith.index_cast %563 : i32 to index
    %c0_251 = arith.constant 0 : index
    %c0_252 = arith.constant 0 : index
    %572 = vector.load %arg2[%571, %c0_251, %c0_252] : memref<8x2x128xf32, #tpu.memory_space<vmem>>, vector<1x2x128xf32>
    %573 = vector.shape_cast %572 : vector<1x2x128xf32> to vector<2x128xf32>
    %c0_253 = arith.constant 0 : index
    %c0_254 = arith.constant 0 : index
    %574 = vector.load %arg9[%c0_253, %c0_254] : memref<2x32xf32, #tpu.memory_space<vmem>>, vector<2x32xf32>
    %575 = arith.truncf %574 : vector<2x32xf32> to vector<2x32xbf16>
    %cst_255 = arith.constant dense<0.000000e+00> : vector<2x128xf32>
    %576 = tpu.matmul %575, %9, %cst_255 {dimension_numbers = #tpu.dot_dimension_numbers<[1], [0], [0], [1], [0, 0, 1, 1], [], []>} : vector<2x32xbf16>, vector<32x128xbf16>, vector<2x128xf32> -> vector<2x128xf32>
    %577 = arith.addf %573, %576 : vector<2x128xf32>
    %c0_256 = arith.constant 0 : index
    %c0_257 = arith.constant 0 : index
    %578 = vector.load %arg8[%c0_256, %c0_257] : memref<2x32xf32, #tpu.memory_space<vmem>>, vector<2x32xf32>
    %579 = vector.extract_strided_slice %570 {offsets = [0, 0], sizes = [2, 32], strides = [1, 1]} : vector<2x128xf32> to vector<2x32xf32>
    %580 = arith.negf %579 : vector<2x32xf32>
    %581 = math.exp %580 : vector<2x32xf32>
    %cst_258 = arith.constant 1.000000e+00 : f32
    %582 = vector.broadcast %cst_258 : f32 to vector<2x32xf32>
    %583 = arith.addf %582, %581 : vector<2x32xf32>
    %584 = arith.divf %582, %583 : vector<2x32xf32>
    %585 = vector.extract_strided_slice %570 {offsets = [0, 32], sizes = [2, 32], strides = [1, 1]} : vector<2x128xf32> to vector<2x32xf32>
    %586 = arith.negf %585 : vector<2x32xf32>
    %587 = math.exp %586 : vector<2x32xf32>
    %cst_259 = arith.constant 1.000000e+00 : f32
    %588 = vector.broadcast %cst_259 : f32 to vector<2x32xf32>
    %589 = arith.addf %588, %587 : vector<2x32xf32>
    %590 = arith.divf %588, %589 : vector<2x32xf32>
    %591 = vector.extract_strided_slice %570 {offsets = [0, 64], sizes = [2, 32], strides = [1, 1]} : vector<2x128xf32> to vector<2x32xf32>
    %592 = math.tanh %591 : vector<2x32xf32>
    %593 = vector.extract_strided_slice %570 {offsets = [0, 96], sizes = [2, 32], strides = [1, 1]} : vector<2x128xf32> to vector<2x32xf32>
    %594 = arith.negf %593 : vector<2x32xf32>
    %595 = math.exp %594 : vector<2x32xf32>
    %cst_260 = arith.constant 1.000000e+00 : f32
    %596 = vector.broadcast %cst_260 : f32 to vector<2x32xf32>
    %597 = arith.addf %596, %595 : vector<2x32xf32>
    %598 = arith.divf %596, %597 : vector<2x32xf32>
    %599 = arith.mulf %590, %578 : vector<2x32xf32>
    %600 = arith.mulf %584, %592 : vector<2x32xf32>
    %601 = arith.addf %599, %600 : vector<2x32xf32>
    %602 = math.tanh %601 : vector<2x32xf32>
    %603 = arith.mulf %598, %602 : vector<2x32xf32>
    %c0_261 = arith.constant 0 : index
    %c0_262 = arith.constant 0 : index
    %604 = vector.load %arg10[%c0_261, %c0_262] : memref<2x32xf32, #tpu.memory_space<vmem>>, vector<2x32xf32>
    %605 = vector.extract_strided_slice %577 {offsets = [0, 0], sizes = [2, 32], strides = [1, 1]} : vector<2x128xf32> to vector<2x32xf32>
    %606 = arith.negf %605 : vector<2x32xf32>
    %607 = math.exp %606 : vector<2x32xf32>
    %cst_263 = arith.constant 1.000000e+00 : f32
    %608 = vector.broadcast %cst_263 : f32 to vector<2x32xf32>
    %609 = arith.addf %608, %607 : vector<2x32xf32>
    %610 = arith.divf %608, %609 : vector<2x32xf32>
    %611 = vector.extract_strided_slice %577 {offsets = [0, 32], sizes = [2, 32], strides = [1, 1]} : vector<2x128xf32> to vector<2x32xf32>
    %612 = arith.negf %611 : vector<2x32xf32>
    %613 = math.exp %612 : vector<2x32xf32>
    %cst_264 = arith.constant 1.000000e+00 : f32
    %614 = vector.broadcast %cst_264 : f32 to vector<2x32xf32>
    %615 = arith.addf %614, %613 : vector<2x32xf32>
    %616 = arith.divf %614, %615 : vector<2x32xf32>
    %617 = vector.extract_strided_slice %577 {offsets = [0, 64], sizes = [2, 32], strides = [1, 1]} : vector<2x128xf32> to vector<2x32xf32>
    %618 = math.tanh %617 : vector<2x32xf32>
    %619 = vector.extract_strided_slice %577 {offsets = [0, 96], sizes = [2, 32], strides = [1, 1]} : vector<2x128xf32> to vector<2x32xf32>
    %620 = arith.negf %619 : vector<2x32xf32>
    %621 = math.exp %620 : vector<2x32xf32>
    %cst_265 = arith.constant 1.000000e+00 : f32
    %622 = vector.broadcast %cst_265 : f32 to vector<2x32xf32>
    %623 = arith.addf %622, %621 : vector<2x32xf32>
    %624 = arith.divf %622, %623 : vector<2x32xf32>
    %625 = arith.mulf %616, %604 : vector<2x32xf32>
    %626 = arith.mulf %610, %618 : vector<2x32xf32>
    %627 = arith.addf %625, %626 : vector<2x32xf32>
    %628 = math.tanh %627 : vector<2x32xf32>
    %629 = arith.mulf %624, %628 : vector<2x32xf32>
    %c0_266 = arith.constant 0 : index
    %c0_267 = arith.constant 0 : index
    %630 = vector.load %arg7[%c0_266, %c0_267] : memref<2x32xf32, #tpu.memory_space<vmem>>, vector<2x32xf32>
    tpu.vector_store %arg7[%c0_266, %c0_267], %603 {strides = array<i32>} : memref<2x32xf32, #tpu.memory_space<vmem>>, vector<2x32xf32>,
    %c0_268 = arith.constant 0 : index
    %c0_269 = arith.constant 0 : index
    %631 = vector.load %arg8[%c0_268, %c0_269] : memref<2x32xf32, #tpu.memory_space<vmem>>, vector<2x32xf32>
    tpu.vector_store %arg8[%c0_268, %c0_269], %601 {strides = array<i32>} : memref<2x32xf32, #tpu.memory_space<vmem>>, vector<2x32xf32>,
    %c0_270 = arith.constant 0 : index
    %c0_271 = arith.constant 0 : index
    %632 = vector.load %arg9[%c0_270, %c0_271] : memref<2x32xf32, #tpu.memory_space<vmem>>, vector<2x32xf32>
    tpu.vector_store %arg9[%c0_270, %c0_271], %629 {strides = array<i32>} : memref<2x32xf32, #tpu.memory_space<vmem>>, vector<2x32xf32>,
    %c0_272 = arith.constant 0 : index
    %c0_273 = arith.constant 0 : index
    %633 = vector.load %arg10[%c0_272, %c0_273] : memref<2x32xf32, #tpu.memory_space<vmem>>, vector<2x32xf32>
    tpu.vector_store %arg10[%c0_272, %c0_273], %627 {strides = array<i32>} : memref<2x32xf32, #tpu.memory_space<vmem>>, vector<2x32xf32>,
    %634 = arith.index_cast %c7_i32_244 : i32 to index
    %c0_274 = arith.constant 0 : index
    %c0_275 = arith.constant 0 : index
    %635 = vector.load %arg5[%634, %c0_274, %c0_275] : memref<8x2x32xf32, #tpu.memory_space<vmem>>, vector<1x2x32xf32>
    %636 = vector.shape_cast %635 : vector<1x2x32xf32> to vector<2x32xf32>
    %637 = vector.shape_cast %603 : vector<2x32xf32> to vector<1x2x32xf32>
    tpu.vector_store %arg5[%634, %c0_274, %c0_275], %637 {strides = array<i32>} : memref<8x2x32xf32, #tpu.memory_space<vmem>>, vector<1x2x32xf32>,
    %638 = arith.index_cast %563 : i32 to index
    %c0_276 = arith.constant 0 : index
    %c0_277 = arith.constant 0 : index
    %639 = vector.load %arg6[%638, %c0_276, %c0_277] : memref<8x2x32xf32, #tpu.memory_space<vmem>>, vector<1x2x32xf32>
    %640 = vector.shape_cast %639 : vector<1x2x32xf32> to vector<2x32xf32>
    %641 = vector.shape_cast %629 : vector<2x32xf32> to vector<1x2x32xf32>
    tpu.vector_store %arg6[%638, %c0_276, %c0_277], %641 {strides = array<i32>} : memref<8x2x32xf32, #tpu.memory_space<vmem>>, vector<1x2x32xf32>,
    %c8_i32 = arith.constant 8 : i32
    return
  }
  func.func @transform_0(%arg0: i32) -> (i32, i32, i32) {
    %c0_i32 = arith.constant 0 : i32
    %c0_i32_0 = arith.constant 0 : i32
    %c0_i32_1 = arith.constant 0 : i32
    %c0_i32_2 = arith.constant 0 : i32
    return %c0_i32, %c0_i32_0, %c0_i32_1 : i32, i32, i32
  }
  func.func @transform_1(%arg0: i32) -> (i32, i32, i32) {
    %c0_i32 = arith.constant 0 : i32
    %c0_i32_0 = arith.constant 0 : i32
    %c0_i32_1 = arith.constant 0 : i32
    %c0_i32_2 = arith.constant 0 : i32
    return %c0_i32, %c0_i32_0, %c0_i32_1 : i32, i32, i32
  }
  func.func @transform_2(%arg0: i32) -> (i32, i32) {
    %c0_i32 = arith.constant 0 : i32
    %c0_i32_0 = arith.constant 0 : i32
    %c0_i32_1 = arith.constant 0 : i32
    return %c0_i32, %c0_i32_0 : i32, i32
  }
  func.func @transform_3(%arg0: i32) -> (i32, i32) {
    %c0_i32 = arith.constant 0 : i32
    %c0_i32_0 = arith.constant 0 : i32
    %c0_i32_1 = arith.constant 0 : i32
    return %c0_i32, %c0_i32_0 : i32, i32
  }
  func.func @transform_4(%arg0: i32) -> (i32, i32, i32) {
    %c0_i32 = arith.constant 0 : i32
    %c0_i32_0 = arith.constant 0 : i32
    %c0_i32_1 = arith.constant 0 : i32
    %c0_i32_2 = arith.constant 0 : i32
    return %c0_i32, %c0_i32_0, %c0_i32_1 : i32, i32, i32
  }
  func.func @transform_5(%arg0: i32) -> (i32, i32, i32) {
    %c0_i32 = arith.constant 0 : i32
    %c0_i32_0 = arith.constant 0 : i32
    %c0_i32_1 = arith.constant 0 : i32
    %c0_i32_2 = arith.constant 0 : i32
    return %c0_i32, %c0_i32_0, %c0_i32_1 : i32, i32, i32
  }
}

</mosaic_0001>

<llo_original>
// kernel: time_series_bilstm.2
$region0: #{time_series_bilstm.2}
  #allocation0 [shape = 'u32[]', space=smem, size = 0x4, offset = 0x4, fixed_abs, tag = 'smem constant byte address 0x4 - core index']
  #allocation1 [shape = 'u32[144,128]{1,0:T(1,128)}', space=vmem, size = 0x12000, scoped, tag = 'internal scratch']
  #allocation2 [shape = 'f32[2,32]{1,0:T(2,128)}', space=vmem, size = 0x400, scoped, tag = 'scratch operand']
  #allocation3 [shape = 'f32[2,32]{1,0:T(2,128)}', space=vmem, size = 0x400, scoped, tag = 'scratch operand']
  #allocation4 [shape = 'f32[2,32]{1,0:T(2,128)}', space=vmem, size = 0x400, scoped, tag = 'scratch operand']
  #allocation5 [shape = 'f32[2,32]{1,0:T(2,128)}', space=vmem, size = 0x400, scoped, tag = 'scratch operand']
  %s0 = inlined_call_operand.vmem [shape: f32[8,2,128], index: 0, kind: input, shape index: {}]
  %s1 = inlined_call_operand.vmem [shape: f32[8,2,128], index: 1, kind: input, shape index: {}]
  %s2 = inlined_call_operand.vmem [shape: bf16[32,128], index: 2, kind: input, shape index: {}]
  %s3 = inlined_call_operand.vmem [shape: bf16[32,128], index: 3, kind: input, shape index: {}]
  %s4 = inlined_call_operand.vmem [shape: f32[8,2,32], index: 4, kind: output, shape index: {0}]
  %s5 = inlined_call_operand.vmem [shape: f32[8,2,32], index: 5, kind: output, shape index: {1}]
  %6 = xla_tuple %s4, %s5
  %s7 = sld [smem:[#allocation0]]
  $region34: #{time_series_bilstm.2} parent=0
    _
  %s9 = ssub.s32 1, %s7
  %s10 = scalar_select 0, %s9, %s7
  // Predicated region
  $region2: #{time_series_bilstm.2} parent=0 // pred_check
    _
  $region3: #{time_series_bilstm.2} parent=0 // pred_check_branch
    %12 = sbr.rel (0) target = $region5
  $region4: #{time_series_bilstm.2} parent=0 // pred_region
    _
  $region5: #{time_series_bilstm.2} parent=0 // pred_fallthru
    _
  // Predicated region
  $region6: #{time_series_bilstm.2} parent=0 // pred_check
    _
  $region7: #{time_series_bilstm.2} parent=0 // pred_check_branch
    %14 = sbr.rel (0) target = $region9
  $region8: #{time_series_bilstm.2} parent=0 // pred_region
    _
  $region9: #{time_series_bilstm.2} parent=0 // pred_fallthru
    _
  // Predicated region
  $region10: #{time_series_bilstm.2} parent=0 // pred_check
    _
  $region11: #{time_series_bilstm.2} parent=0 // pred_check_branch
    %16 = sbr.rel (0) target = $region13
  $region12: #{time_series_bilstm.2} parent=0 // pred_region
    _
  $region13: #{time_series_bilstm.2} parent=0 // pred_fallthru
    _
  // Predicated region
  $region14: #{time_series_bilstm.2} parent=0 // pred_check
    _
  $region15: #{time_series_bilstm.2} parent=0 // pred_check_branch
    %18 = sbr.rel (0) target = $region17
  $region16: #{time_series_bilstm.2} parent=0 // pred_region
    _
  $region17: #{time_series_bilstm.2} parent=0 // pred_fallthru
    _
  %vm20 = vcmask 254976
  %21 = vst.msk [vmem:[#allocation2] sm:$0x3] %vm20, 0.0
  %22 = vst.msk [vmem:[#allocation3] sm:$0x3] %vm20, 0.0
  %23 = vst.msk [vmem:[#allocation4] sm:$0x3] %vm20, 0.0
  %24 = vst.msk [vmem:[#allocation5] sm:$0x3] %vm20, 0.0
  %v25 = vld [vmem:[%s2] sm:$0xf]
  %v26 = vld [vmem:[%s2 + $0x4] sm:$0xf]
  %v27 = vld [vmem:[%s2 + $0x8] sm:$0xf]
  %v28 = vld [vmem:[%s2 + $0xc] sm:$0xf]
  %v29 = vld [vmem:[%s3] sm:$0xf]
  %v30 = vld [vmem:[%s3 + $0x4] sm:$0xf]
  %v31 = vld [vmem:[%s3 + $0x8] sm:$0xf]
  %v32 = vld [vmem:[%s3 + $0xc] sm:$0xf]
  %v33 = vld [vmem:[%s0] sm:$0x3]
  %v34 = vld [vmem:[#allocation2] sm:$0x3]
  %v35 = vpack.c.bf16 %v34, %v34
  %v40 = vunpack.c.l.b16 %v25
  %v41 = vunpack.c.l.b16 %v26
  %v42 = vunpack.c.l.b16 %v27
  %v43 = vunpack.c.l.b16 %v28
  %v44 = vpack.c.b16 %v41, %v40
  %v45 = vpack.c.b16 %v43, %v42
  %vm48 = vcmask 261120
  %v50 = vsel %vm48, %v35, 0
  %52 = vmatprep.subr.bf16.mxu0 0
  %53 = vmatpush1.bf16.msra.mxu0 %v44
  %54 = vmatprep.subr.bf16.mxu0 0
  %55 = vmatpush1.bf16.msra.mxu0 %v45
  %56 = vmatprep.subr.bf16.mxu0 0
  %57 = vmatpush1.bf16.msra.mxu0 0
  %58 = vmatprep.subr.bf16.mxu0 0
  %59 = vmatpush1.bf16.msra.mxu0 0
  %60 = vmatprep.subr.bf16.mxu0 0
  %61 = vmatpush1.bf16.msra.mxu0 0
  %62 = vmatprep.subr.bf16.mxu0 0
  %63 = vmatpush1.bf16.msra.mxu0 0
  %64 = vmatprep.subr.bf16.mxu0 0
  %65 = vmatpush1.bf16.msra.mxu0 0
  %66 = vmatprep.subr.bf16.mxu0 0
  %67 = vmatpush1.bf16.msra.mxu0 0
  %68 = vmatprep.subr.bf16.mxu0 0
  %69 = vmatpush1.bf16.msra.mxu0 0
  %70 = vmatprep.subr.bf16.mxu0 0
  %71 = vmatpush1.bf16.msra.mxu0 0
  %72 = vmatprep.subr.bf16.mxu0 0
  %73 = vmatpush1.bf16.msra.mxu0 0
  %74 = vmatprep.subr.bf16.mxu0 0
  %75 = vmatpush1.bf16.msra.mxu0 0
  %76 = vmatprep.subr.bf16.mxu0 0
  %77 = vmatpush1.bf16.msra.mxu0 0
  %78 = vmatprep.subr.bf16.mxu0 0
  %79 = vmatpush1.bf16.msra.mxu0 0
  %80 = vmatprep.subr.bf16.mxu0 0
  %81 = vmatpush1.bf16.msra.mxu0 0
  %82 = vmatprep.subr.bf16.mxu0 0
  %83 = vmatpush1.bf16.msra.mxu0 0
  %84 = vmatprep.mubr.bf16.mxu0 0
  %85 = vmatmul.mubr.bf16.gmra.mrb[0].mxu0 %v50
  %v86 = vpop.f32.mrb[0].mxu0
  %v87 = vadd.f32 0.0, %v86
  %v88 = vpop.f32.mrb[0].mxu0
  %v89 = vpop.f32.mrb[0].mxu0
  %v90 = vpop.f32.mrb[0].mxu0
  %91 = vdwg.mxu0
  %v92 = vadd.f32 %v33, %v87
  %s93 = scalar_lea.vmem %s1, 14
  %v94 = vld [vmem:[%s93] sm:$0x3]
  %v95 = vld [vmem:[#allocation4] sm:$0x3]
  %v96 = vpack.c.bf16 %v95, %v95
  %v101 = vunpack.c.l.b16 %v29
  %v102 = vunpack.c.l.b16 %v30
  %v103 = vunpack.c.l.b16 %v31
  %v104 = vunpack.c.l.b16 %v32
  %v105 = vpack.c.b16 %v102, %v101
  %v106 = vpack.c.b16 %v104, %v103
  %v110 = vsel %vm48, %v96, 0
  %112 = vmatprep.subr.bf16.mxu0 0
  %113 = vmatpush1.bf16.msra.mxu0 %v105
  %114 = vmatprep.subr.bf16.mxu0 0
  %115 = vmatpush1.bf16.msra.mxu0 %v106
  %116 = vmatprep.subr.bf16.mxu0 0
  %117 = vmatpush1.bf16.msra.mxu0 0
  %118 = vmatprep.subr.bf16.mxu0 0
  %119 = vmatpush1.bf16.msra.mxu0 0
  %120 = vmatprep.subr.bf16.mxu0 0
  %121 = vmatpush1.bf16.msra.mxu0 0
  %122 = vmatprep.subr.bf16.mxu0 0
  %123 = vmatpush1.bf16.msra.mxu0 0
  %124 = vmatprep.subr.bf16.mxu0 0
  %125 = vmatpush1.bf16.msra.mxu0 0
  %126 = vmatprep.subr.bf16.mxu0 0
  %127 = vmatpush1.bf16.msra.mxu0 0
  %128 = vmatprep.subr.bf16.mxu0 0
  %129 = vmatpush1.bf16.msra.mxu0 0
  %130 = vmatprep.subr.bf16.mxu0 0
  %131 = vmatpush1.bf16.msra.mxu0 0
  %132 = vmatprep.subr.bf16.mxu0 0
  %133 = vmatpush1.bf16.msra.mxu0 0
  %134 = vmatprep.subr.bf16.mxu0 0
  %135 = vmatpush1.bf16.msra.mxu0 0
  %136 = vmatprep.subr.bf16.mxu0 0
  %137 = vmatpush1.bf16.msra.mxu0 0
  %138 = vmatprep.subr.bf16.mxu0 0
  %139 = vmatpush1.bf16.msra.mxu0 0
  %140 = vmatprep.subr.bf16.mxu0 0
  %141 = vmatpush1.bf16.msra.mxu0 0
  %142 = vmatprep.subr.bf16.mxu0 0
  %143 = vmatpush1.bf16.msra.mxu0 0
  %144 = vmatprep.mubr.bf16.mxu0 0
  %145 = vmatmul.mubr.bf16.gmra.mrb[0].mxu0 %v110
  %v146 = vpop.f32.mrb[0].mxu0
  %v147 = vadd.f32 0.0, %v146
  %v148 = vpop.f32.mrb[0].mxu0
  %v149 = vpop.f32.mrb[0].mxu0
  %v150 = vpop.f32.mrb[0].mxu0
  %151 = vdwg.mxu0
  %v152 = vadd.f32 %v94, %v147
  %v153 = vld [vmem:[#allocation3] sm:$0x3]
  %v154 = vxor.u32 %v92, 2147483648
  %v155 = vmul.f32 %v154, 1.442695
  %v156 = vpow.pop %v155
  %v157 = vadd.f32 %v156, 1.0
  %v158 = vrcp.pop %v157
  %v159 = vmul.f32 1.0, %v158
  %v160 = vtanh.pop %v92
  %162 = vrot.lane.b32.xlu0 %v153, 32
  %v163 = vpop.permute.xlu0 %162
  %v165 = vmul.f32 %v159, %v163
  %167 = vrot.lane.b32.xlu0 %v160, 64
  %v168 = vpop.permute.xlu0 %167
  %v170 = vmul.f32 %v159, %v168
  %172 = vrot.lane.b32.xlu0 %v170, 32
  %v173 = vpop.permute.xlu0 %172
  %v175 = vadd.f32 %v165, %v173
  %v176 = vtanh.pop %v175
  %178 = vrot.lane.b32.xlu0 %v176, 64
  %v179 = vpop.permute.xlu0 %178
  %v181 = vmul.f32 %v159, %v179
  %v182 = vld [vmem:[#allocation5] sm:$0x3]
  %v183 = vxor.u32 %v152, 2147483648
  %v184 = vmul.f32 %v183, 1.442695
  %v185 = vpow.pop %v184
  %v186 = vadd.f32 %v185, 1.0
  %v187 = vrcp.pop %v186
  %v188 = vmul.f32 1.0, %v187
  %v189 = vtanh.pop %v152
  %191 = vrot.lane.b32.xlu0 %v182, 32
  %v192 = vpop.permute.xlu0 %191
  %v194 = vmul.f32 %v188, %v192
  %196 = vrot.lane.b32.xlu0 %v189, 64
  %v197 = vpop.permute.xlu0 %196
  %v199 = vmul.f32 %v188, %v197
  %201 = vrot.lane.b32.xlu0 %v199, 32
  %v202 = vpop.permute.xlu0 %201
  %v204 = vadd.f32 %v194, %v202
  %v205 = vtanh.pop %v204
  %207 = vrot.lane.b32.xlu0 %v205, 64
  %v208 = vpop.permute.xlu0 %207
  %v210 = vmul.f32 %v188, %v208
  %212 = vrot.lane.b32.xlu0 %v181, 32
  %v213 = vpop.permute.xlu0 %212
  %215 = vst.msk [vmem:[#allocation2] sm:$0x3] %vm20, %v213
  %217 = vrot.lane.b32.xlu0 %v175, 96
  %v218 = vpop.permute.xlu0 %217
  %220 = vst.msk [vmem:[#allocation3] sm:$0x3] %vm20, %v218
  %222 = vrot.lane.b32.xlu0 %v210, 32
  %v223 = vpop.permute.xlu0 %222
  %225 = vst.msk [vmem:[#allocation4] sm:$0x3] %vm20, %v223
  %227 = vrot.lane.b32.xlu0 %v204, 96
  %v228 = vpop.permute.xlu0 %227
  %230 = vst.msk [vmem:[#allocation5] sm:$0x3] %vm20, %v228
  %231 = vst.msk [vmem:[%s4] sm:$0x3] %vm20, %v213
  %s232 = scalar_lea.vmem %s5, 14
  %233 = vst.msk [vmem:[%s232] sm:$0x3] %vm20, %v223
  %s234 = scalar_lea.vmem %s0, 2
  %v235 = vld [vmem:[%s234] sm:$0x3]
  %v236 = vld [vmem:[#allocation2] sm:$0x3]
  %v237 = vpack.c.bf16 %v236, %v236
  %v239 = vsel %vm48, %v237, 0
  %241 = vmatprep.subr.bf16.mxu0 0
  %242 = vmatpush1.bf16.msra.mxu0 %v44
  %243 = vmatprep.subr.bf16.mxu0 0
  %244 = vmatpush1.bf16.msra.mxu0 %v45
  %245 = vmatprep.subr.bf16.mxu0 0
  %246 = vmatpush1.bf16.msra.mxu0 0
  %247 = vmatprep.subr.bf16.mxu0 0
  %248 = vmatpush1.bf16.msra.mxu0 0
  %249 = vmatprep.subr.bf16.mxu0 0
  %250 = vmatpush1.bf16.msra.mxu0 0
  %251 = vmatprep.subr.bf16.mxu0 0
  %252 = vmatpush1.bf16.msra.mxu0 0
  %253 = vmatprep.subr.bf16.mxu0 0
  %254 = vmatpush1.bf16.msra.mxu0 0
  %255 = vmatprep.subr.bf16.mxu0 0
  %256 = vmatpush1.bf16.msra.mxu0 0
  %257 = vmatprep.subr.bf16.mxu0 0
  %258 = vmatpush1.bf16.msra.mxu0 0
  %259 = vmatprep.subr.bf16.mxu0 0
  %260 = vmatpush1.bf16.msra.mxu0 0
  %261 = vmatprep.subr.bf16.mxu0 0
  %262 = vmatpush1.bf16.msra.mxu0 0
  %263 = vmatprep.subr.bf16.mxu0 0
  %264 = vmatpush1.bf16.msra.mxu0 0
  %265 = vmatprep.subr.bf16.mxu0 0
  %266 = vmatpush1.bf16.msra.mxu0 0
  %267 = vmatprep.subr.bf16.mxu0 0
  %268 = vmatpush1.bf16.msra.mxu0 0
  %269 = vmatprep.subr.bf16.mxu0 0
  %270 = vmatpush1.bf16.msra.mxu0 0
  %271 = vmatprep.subr.bf16.mxu0 0
  %272 = vmatpush1.bf16.msra.mxu0 0
  %273 = vmatprep.mubr.bf16.mxu0 0
  %274 = vmatmul.mubr.bf16.gmra.mrb[0].mxu0 %v239
  %v275 = vpop.f32.mrb[0].mxu0
  %v276 = vadd.f32 0.0, %v275
  %v277 = vpop.f32.mrb[0].mxu0
  %v278 = vpop.f32.mrb[0].mxu0
  %v279 = vpop.f32.mrb[0].mxu0
  %280 = vdwg.mxu0
  %v281 = vadd.f32 %v235, %v276
  %s282 = scalar_lea.vmem %s1, 12
  %v283 = vld [vmem:[%s282] sm:$0x3]
  %v284 = vld [vmem:[#allocation4] sm:$0x3]
  %v285 = vpack.c.bf16 %v284, %v284
  %v287 = vsel %vm48, %v285, 0
  %289 = vmatprep.subr.bf16.mxu0 0
  %290 = vmatpush1.bf16.msra.mxu0 %v105
  %291 = vmatprep.subr.bf16.mxu0 0
  %292 = vmatpush1.bf16.msra.mxu0 %v106
  %293 = vmatprep.subr.bf16.mxu0 0
  %294 = vmatpush1.bf16.msra.mxu0 0
  %295 = vmatprep.subr.bf16.mxu0 0
  %296 = vmatpush1.bf16.msra.mxu0 0
  %297 = vmatprep.subr.bf16.mxu0 0
  %298 = vmatpush1.bf16.msra.mxu0 0
  %299 = vmatprep.subr.bf16.mxu0 0
  %300 = vmatpush1.bf16.msra.mxu0 0
  %301 = vmatprep.subr.bf16.mxu0 0
  %302 = vmatpush1.bf16.msra.mxu0 0
  %303 = vmatprep.subr.bf16.mxu0 0
  %304 = vmatpush1.bf16.msra.mxu0 0
  %305 = vmatprep.subr.bf16.mxu0 0
  %306 = vmatpush1.bf16.msra.mxu0 0
  %307 = vmatprep.subr.bf16.mxu0 0
  %308 = vmatpush1.bf16.msra.mxu0 0
  %309 = vmatprep.subr.bf16.mxu0 0
  %310 = vmatpush1.bf16.msra.mxu0 0
  %311 = vmatprep.subr.bf16.mxu0 0
  %312 = vmatpush1.bf16.msra.mxu0 0
  %313 = vmatprep.subr.bf16.mxu0 0
  %314 = vmatpush1.bf16.msra.mxu0 0
  %315 = vmatprep.subr.bf16.mxu0 0
  %316 = vmatpush1.bf16.msra.mxu0 0
  %317 = vmatprep.subr.bf16.mxu0 0
  %318 = vmatpush1.bf16.msra.mxu0 0
  %319 = vmatprep.subr.bf16.mxu0 0
  %320 = vmatpush1.bf16.msra.mxu0 0
  %321 = vmatprep.mubr.bf16.mxu0 0
  %322 = vmatmul.mubr.bf16.gmra.mrb[0].mxu0 %v287
  %v323 = vpop.f32.mrb[0].mxu0
  %v324 = vadd.f32 0.0, %v323
  %v325 = vpop.f32.mrb[0].mxu0
  %v326 = vpop.f32.mrb[0].mxu0
  %v327 = vpop.f32.mrb[0].mxu0
  %328 = vdwg.mxu0
  %v329 = vadd.f32 %v283, %v324
  %v330 = vld [vmem:[#allocation3] sm:$0x3]
  %v331 = vxor.u32 %v281, 2147483648
  %v332 = vmul.f32 %v331, 1.442695
  %v333 = vpow.pop %v332
  %v334 = vadd.f32 %v333, 1.0
  %v335 = vrcp.pop %v334
  %v336 = vmul.f32 1.0, %v335
  %v337 = vtanh.pop %v281
  %339 = vrot.lane.b32.xlu0 %v330, 32
  %v340 = vpop.permute.xlu0 %339
  %v342 = vmul.f32 %v336, %v340
  %344 = vrot.lane.b32.xlu0 %v337, 64
  %v345 = vpop.permute.xlu0 %344
  %v347 = vmul.f32 %v336, %v345
  %349 = vrot.lane.b32.xlu0 %v347, 32
  %v350 = vpop.permute.xlu0 %349
  %v352 = vadd.f32 %v342, %v350
  %v353 = vtanh.pop %v352
  %355 = vrot.lane.b32.xlu0 %v353, 64
  %v356 = vpop.permute.xlu0 %355
  %v358 = vmul.f32 %v336, %v356
  %v359 = vld [vmem:[#allocation5] sm:$0x3]
  %v360 = vxor.u32 %v329, 2147483648
  %v361 = vmul.f32 %v360, 1.442695
  %v362 = vpow.pop %v361
  %v363 = vadd.f32 %v362, 1.0
  %v364 = vrcp.pop %v363
  %v365 = vmul.f32 1.0, %v364
  %v366 = vtanh.pop %v329
  %368 = vrot.lane.b32.xlu0 %v359, 32
  %v369 = vpop.permute.xlu0 %368
  %v371 = vmul.f32 %v365, %v369
  %373 = vrot.lane.b32.xlu0 %v366, 64
  %v374 = vpop.permute.xlu0 %373
  %v376 = vmul.f32 %v365, %v374
  %378 = vrot.lane.b32.xlu0 %v376, 32
  %v379 = vpop.permute.xlu0 %378
  %v381 = vadd.f32 %v371, %v379
  %v382 = vtanh.pop %v381
  %384 = vrot.lane.b32.xlu0 %v382, 64
  %v385 = vpop.permute.xlu0 %384
  %v387 = vmul.f32 %v365, %v385
  %389 = vrot.lane.b32.xlu0 %v358, 32
  %v390 = vpop.permute.xlu0 %389
  %392 = vst.msk [vmem:[#allocation2] sm:$0x3] %vm20, %v390
  %394 = vrot.lane.b32.xlu0 %v352, 96
  %v395 = vpop.permute.xlu0 %394
  %397 = vst.msk [vmem:[#allocation3] sm:$0x3] %vm20, %v395
  %399 = vrot.lane.b32.xlu0 %v387, 32
  %v400 = vpop.permute.xlu0 %399
  %402 = vst.msk [vmem:[#allocation4] sm:$0x3] %vm20, %v400
  %404 = vrot.lane.b32.xlu0 %v381, 96
  %v405 = vpop.permute.xlu0 %404
  %407 = vst.msk [vmem:[#allocation5] sm:$0x3] %vm20, %v405
  %s408 = scalar_lea.vmem %s4, 2
  %409 = vst.msk [vmem:[%s408] sm:$0x3] %vm20, %v390
  %s410 = scalar_lea.vmem %s5, 12
  %411 = vst.msk [vmem:[%s410] sm:$0x3] %vm20, %v400
  %s412 = scalar_lea.vmem %s0, 4
  %v413 = vld [vmem:[%s412] sm:$0x3]
  %v414 = vld [vmem:[#allocation2] sm:$0x3]
  %v415 = vpack.c.bf16 %v414, %v414
  %v417 = vsel %vm48, %v415, 0
  %419 = vmatprep.subr.bf16.mxu0 0
  %420 = vmatpush1.bf16.msra.mxu0 %v44
  %421 = vmatprep.subr.bf16.mxu0 0
  %422 = vmatpush1.bf16.msra.mxu0 %v45
  %423 = vmatprep.subr.bf16.mxu0 0
  %424 = vmatpush1.bf16.msra.mxu0 0
  %425 = vmatprep.subr.bf16.mxu0 0
  %426 = vmatpush1.bf16.msra.mxu0 0
  %427 = vmatprep.subr.bf16.mxu0 0
  %428 = vmatpush1.bf16.msra.mxu0 0
  %429 = vmatprep.subr.bf16.mxu0 0
  %430 = vmatpush1.bf16.msra.mxu0 0
  %431 = vmatprep.subr.bf16.mxu0 0
  %432 = vmatpush1.bf16.msra.mxu0 0
  %433 = vmatprep.subr.bf16.mxu0 0
  %434 = vmatpush1.bf16.msra.mxu0 0
  %435 = vmatprep.subr.bf16.mxu0 0
  %436 = vmatpush1.bf16.msra.mxu0 0
  %437 = vmatprep.subr.bf16.mxu0 0
  %438 = vmatpush1.bf16.msra.mxu0 0
  %439 = vmatprep.subr.bf16.mxu0 0
  %440 = vmatpush1.bf16.msra.mxu0 0
  %441 = vmatprep.subr.bf16.mxu0 0
  %442 = vmatpush1.bf16.msra.mxu0 0
  %443 = vmatprep.subr.bf16.mxu0 0
  %444 = vmatpush1.bf16.msra.mxu0 0
  %445 = vmatprep.subr.bf16.mxu0 0
  %446 = vmatpush1.bf16.msra.mxu0 0
  %447 = vmatprep.subr.bf16.mxu0 0
  %448 = vmatpush1.bf16.msra.mxu0 0
  %449 = vmatprep.subr.bf16.mxu0 0
  %450 = vmatpush1.bf16.msra.mxu0 0
  %451 = vmatprep.mubr.bf16.mxu0 0
  %452 = vmatmul.mubr.bf16.gmra.mrb[0].mxu0 %v417
  %v453 = vpop.f32.mrb[0].mxu0
  %v454 = vadd.f32 0.0, %v453
  %v455 = vpop.f32.mrb[0].mxu0
  %v456 = vpop.f32.mrb[0].mxu0
  %v457 = vpop.f32.mrb[0].mxu0
  %458 = vdwg.mxu0
  %v459 = vadd.f32 %v413, %v454
  %s460 = scalar_lea.vmem %s1, 10
  %v461 = vld [vmem:[%s460] sm:$0x3]
  %v462 = vld [vmem:[#allocation4] sm:$0x3]
  %v463 = vpack.c.bf16 %v462, %v462
  %v465 = vsel %vm48, %v463, 0
  %467 = vmatprep.subr.bf16.mxu0 0
  %468 = vmatpush1.bf16.msra.mxu0 %v105
  %469 = vmatprep.subr.bf16.mxu0 0
  %470 = vmatpush1.bf16.msra.mxu0 %v106
  %471 = vmatprep.subr.bf16.mxu0 0
  %472 = vmatpush1.bf16.msra.mxu0 0
  %473 = vmatprep.subr.bf16.mxu0 0
  %474 = vmatpush1.bf16.msra.mxu0 0
  %475 = vmatprep.subr.bf16.mxu0 0
  %476 = vmatpush1.bf16.msra.mxu0 0
  %477 = vmatprep.subr.bf16.mxu0 0
  %478 = vmatpush1.bf16.msra.mxu0 0
  %479 = vmatprep.subr.bf16.mxu0 0
  %480 = vmatpush1.bf16.msra.mxu0 0
  %481 = vmatprep.subr.bf16.mxu0 0
  %482 = vmatpush1.bf16.msra.mxu0 0
  %483 = vmatprep.subr.bf16.mxu0 0
  %484 = vmatpush1.bf16.msra.mxu0 0
  %485 = vmatprep.subr.bf16.mxu0 0
  %486 = vmatpush1.bf16.msra.mxu0 0
  %487 = vmatprep.subr.bf16.mxu0 0
  %488 = vmatpush1.bf16.msra.mxu0 0
  %489 = vmatprep.subr.bf16.mxu0 0
  %490 = vmatpush1.bf16.msra.mxu0 0
  %491 = vmatprep.subr.bf16.mxu0 0
  %492 = vmatpush1.bf16.msra.mxu0 0
  %493 = vmatprep.subr.bf16.mxu0 0
  %494 = vmatpush1.bf16.msra.mxu0 0
  %495 = vmatprep.subr.bf16.mxu0 0
  %496 = vmatpush1.bf16.msra.mxu0 0
  %497 = vmatprep.subr.bf16.mxu0 0
  %498 = vmatpush1.bf16.msra.mxu0 0
  %499 = vmatprep.mubr.bf16.mxu0 0
  %500 = vmatmul.mubr.bf16.gmra.mrb[0].mxu0 %v465
  %v501 = vpop.f32.mrb[0].mxu0
  %v502 = vadd.f32 0.0, %v501
  %v503 = vpop.f32.mrb[0].mxu0
  %v504 = vpop.f32.mrb[0].mxu0
  %v505 = vpop.f32.mrb[0].mxu0
  %506 = vdwg.mxu0
  %v507 = vadd.f32 %v461, %v502
  %v508 = vld [vmem:[#allocation3] sm:$0x3]
  %v509 = vxor.u32 %v459, 2147483648
  %v510 = vmul.f32 %v509, 1.442695
  %v511 = vpow.pop %v510
  %v512 = vadd.f32 %v511, 1.0
  %v513 = vrcp.pop %v512
  %v514 = vmul.f32 1.0, %v513
  %v515 = vtanh.pop %v459
  %517 = vrot.lane.b32.xlu0 %v508, 32
  %v518 = vpop.permute.xlu0 %517
  %v520 = vmul.f32 %v514, %v518
  %522 = vrot.lane.b32.xlu0 %v515, 64
  %v523 = vpop.permute.xlu0 %522
  %v525 = vmul.f32 %v514, %v523
  %527 = vrot.lane.b32.xlu0 %v525, 32
  %v528 = vpop.permute.xlu0 %527
  %v530 = vadd.f32 %v520, %v528
  %v531 = vtanh.pop %v530
  %533 = vrot.lane.b32.xlu0 %v531, 64
  %v534 = vpop.permute.xlu0 %533
  %v536 = vmul.f32 %v514, %v534
  %v537 = vld [vmem:[#allocation5] sm:$0x3]
  %v538 = vxor.u32 %v507, 2147483648
  %v539 = vmul.f32 %v538, 1.442695
  %v540 = vpow.pop %v539
  %v541 = vadd.f32 %v540, 1.0
  %v542 = vrcp.pop %v541
  %v543 = vmul.f32 1.0, %v542
  %v544 = vtanh.pop %v507
  %546 = vrot.lane.b32.xlu0 %v537, 32
  %v547 = vpop.permute.xlu0 %546
  %v549 = vmul.f32 %v543, %v547
  %551 = vrot.lane.b32.xlu0 %v544, 64
  %v552 = vpop.permute.xlu0 %551
  %v554 = vmul.f32 %v543, %v552
  %556 = vrot.lane.b32.xlu0 %v554, 32
  %v557 = vpop.permute.xlu0 %556
  %v559 = vadd.f32 %v549, %v557
  %v560 = vtanh.pop %v559
  %562 = vrot.lane.b32.xlu0 %v560, 64
  %v563 = vpop.permute.xlu0 %562
  %v565 = vmul.f32 %v543, %v563
  %567 = vrot.lane.b32.xlu0 %v536, 32
  %v568 = vpop.permute.xlu0 %567
  %570 = vst.msk [vmem:[#allocation2] sm:$0x3] %vm20, %v568
  %572 = vrot.lane.b32.xlu0 %v530, 96
  %v573 = vpop.permute.xlu0 %572
  %575 = vst.msk [vmem:[#allocation3] sm:$0x3] %vm20, %v573
  %577 = vrot.lane.b32.xlu0 %v565, 32
  %v578 = vpop.permute.xlu0 %577
  %580 = vst.msk [vmem:[#allocation4] sm:$0x3] %vm20, %v578
  %582 = vrot.lane.b32.xlu0 %v559, 96
  %v583 = vpop.permute.xlu0 %582
  %585 = vst.msk [vmem:[#allocation5] sm:$0x3] %vm20, %v583
  %s586 = scalar_lea.vmem %s4, 4
  %587 = vst.msk [vmem:[%s586] sm:$0x3] %vm20, %v568
  %s588 = scalar_lea.vmem %s5, 10
  %589 = vst.msk [vmem:[%s588] sm:$0x3] %vm20, %v578
  %s590 = scalar_lea.vmem %s0, 6
  %v591 = vld [vmem:[%s590] sm:$0x3]
  %v592 = vld [vmem:[#allocation2] sm:$0x3]
  %v593 = vpack.c.bf16 %v592, %v592
  %v595 = vsel %vm48, %v593, 0
  %597 = vmatprep.subr.bf16.mxu0 0
  %598 = vmatpush1.bf16.msra.mxu0 %v44
  %599 = vmatprep.subr.bf16.mxu0 0
  %600 = vmatpush1.bf16.msra.mxu0 %v45
  %601 = vmatprep.subr.bf16.mxu0 0
  %602 = vmatpush1.bf16.msra.mxu0 0
  %603 = vmatprep.subr.bf16.mxu0 0
  %604 = vmatpush1.bf16.msra.mxu0 0
  %605 = vmatprep.subr.bf16.mxu0 0
  %606 = vmatpush1.bf16.msra.mxu0 0
  %607 = vmatprep.subr.bf16.mxu0 0
  %608 = vmatpush1.bf16.msra.mxu0 0
  %609 = vmatprep.subr.bf16.mxu0 0
  %610 = vmatpush1.bf16.msra.mxu0 0
  %611 = vmatprep.subr.bf16.mxu0 0
  %612 = vmatpush1.bf16.msra.mxu0 0
  %613 = vmatprep.subr.bf16.mxu0 0
  %614 = vmatpush1.bf16.msra.mxu0 0
  %615 = vmatprep.subr.bf16.mxu0 0
  %616 = vmatpush1.bf16.msra.mxu0 0
  %617 = vmatprep.subr.bf16.mxu0 0
  %618 = vmatpush1.bf16.msra.mxu0 0
  %619 = vmatprep.subr.bf16.mxu0 0
  %620 = vmatpush1.bf16.msra.mxu0 0
  %621 = vmatprep.subr.bf16.mxu0 0
  %622 = vmatpush1.bf16.msra.mxu0 0
  %623 = vmatprep.subr.bf16.mxu0 0
  %624 = vmatpush1.bf16.msra.mxu0 0
  %625 = vmatprep.subr.bf16.mxu0 0
  %626 = vmatpush1.bf16.msra.mxu0 0
  %627 = vmatprep.subr.bf16.mxu0 0
  %628 = vmatpush1.bf16.msra.mxu0 0
  %629 = vmatprep.mubr.bf16.mxu0 0
  %630 = vmatmul.mubr.bf16.gmra.mrb[0].mxu0 %v595
  %v631 = vpop.f32.mrb[0].mxu0
  %v632 = vadd.f32 0.0, %v631
  %v633 = vpop.f32.mrb[0].mxu0
  %v634 = vpop.f32.mrb[0].mxu0
  %v635 = vpop.f32.mrb[0].mxu0
  %636 = vdwg.mxu0
  %v637 = vadd.f32 %v591, %v632
  %s638 = scalar_lea.vmem %s1, 8
  %v639 = vld [vmem:[%s638] sm:$0x3]
  %v640 = vld [vmem:[#allocation4] sm:$0x3]
  %v641 = vpack.c.bf16 %v640, %v640
  %v643 = vsel %vm48, %v641, 0
  %645 = vmatprep.subr.bf16.mxu0 0
  %646 = vmatpush1.bf16.msra.mxu0 %v105
  %647 = vmatprep.subr.bf16.mxu0 0
  %648 = vmatpush1.bf16.msra.mxu0 %v106
  %649 = vmatprep.subr.bf16.mxu0 0
  %650 = vmatpush1.bf16.msra.mxu0 0
  %651 = vmatprep.subr.bf16.mxu0 0
  %652 = vmatpush1.bf16.msra.mxu0 0
  %653 = vmatprep.subr.bf16.mxu0 0
  %654 = vmatpush1.bf16.msra.mxu0 0
  %655 = vmatprep.subr.bf16.mxu0 0
  %656 = vmatpush1.bf16.msra.mxu0 0
  %657 = vmatprep.subr.bf16.mxu0 0
  %658 = vmatpush1.bf16.msra.mxu0 0
  %659 = vmatprep.subr.bf16.mxu0 0
  %660 = vmatpush1.bf16.msra.mxu0 0
  %661 = vmatprep.subr.bf16.mxu0 0
  %662 = vmatpush1.bf16.msra.mxu0 0
  %663 = vmatprep.subr.bf16.mxu0 0
  %664 = vmatpush1.bf16.msra.mxu0 0
  %665 = vmatprep.subr.bf16.mxu0 0
  %666 = vmatpush1.bf16.msra.mxu0 0
  %667 = vmatprep.subr.bf16.mxu0 0
  %668 = vmatpush1.bf16.msra.mxu0 0
  %669 = vmatprep.subr.bf16.mxu0 0
  %670 = vmatpush1.bf16.msra.mxu0 0
  %671 = vmatprep.subr.bf16.mxu0 0
  %672 = vmatpush1.bf16.msra.mxu0 0
  %673 = vmatprep.subr.bf16.mxu0 0
  %674 = vmatpush1.bf16.msra.mxu0 0
  %675 = vmatprep.subr.bf16.mxu0 0
  %676 = vmatpush1.bf16.msra.mxu0 0
  %677 = vmatprep.mubr.bf16.mxu0 0
  %678 = vmatmul.mubr.bf16.gmra.mrb[0].mxu0 %v643
  %v679 = vpop.f32.mrb[0].mxu0
  %v680 = vadd.f32 0.0, %v679
  %v681 = vpop.f32.mrb[0].mxu0
  %v682 = vpop.f32.mrb[0].mxu0
  %v683 = vpop.f32.mrb[0].mxu0
  %684 = vdwg.mxu0
  %v685 = vadd.f32 %v639, %v680
  %v686 = vld [vmem:[#allocation3] sm:$0x3]
  %v687 = vxor.u32 %v637, 2147483648
  %v688 = vmul.f32 %v687, 1.442695
  %v689 = vpow.pop %v688
  %v690 = vadd.f32 %v689, 1.0
  %v691 = vrcp.pop %v690
  %v692 = vmul.f32 1.0, %v691
  %v693 = vtanh.pop %v637
  %695 = vrot.lane.b32.xlu0 %v686, 32
  %v696 = vpop.permute.xlu0 %695
  %v698 = vmul.f32 %v692, %v696
  %700 = vrot.lane.b32.xlu0 %v693, 64
  %v701 = vpop.permute.xlu0 %700
  %v703 = vmul.f32 %v692, %v701
  %705 = vrot.lane.b32.xlu0 %v703, 32
  %v706 = vpop.permute.xlu0 %705
  %v708 = vadd.f32 %v698, %v706
  %v709 = vtanh.pop %v708
  %711 = vrot.lane.b32.xlu0 %v709, 64
  %v712 = vpop.permute.xlu0 %711
  %v714 = vmul.f32 %v692, %v712
  %v715 = vld [vmem:[#allocation5] sm:$0x3]
  %v716 = vxor.u32 %v685, 2147483648
  %v717 = vmul.f32 %v716, 1.442695
  %v718 = vpow.pop %v717
  %v719 = vadd.f32 %v718, 1.0
  %v720 = vrcp.pop %v719
  %v721 = vmul.f32 1.0, %v720
  %v722 = vtanh.pop %v685
  %724 = vrot.lane.b32.xlu0 %v715, 32
  %v725 = vpop.permute.xlu0 %724
  %v727 = vmul.f32 %v721, %v725
  %729 = vrot.lane.b32.xlu0 %v722, 64
  %v730 = vpop.permute.xlu0 %729
  %v732 = vmul.f32 %v721, %v730
  %734 = vrot.lane.b32.xlu0 %v732, 32
  %v735 = vpop.permute.xlu0 %734
  %v737 = vadd.f32 %v727, %v735
  %v738 = vtanh.pop %v737
  %740 = vrot.lane.b32.xlu0 %v738, 64
  %v741 = vpop.permute.xlu0 %740
  %v743 = vmul.f32 %v721, %v741
  %745 = vrot.lane.b32.xlu0 %v714, 32
  %v746 = vpop.permute.xlu0 %745
  %748 = vst.msk [vmem:[#allocation2] sm:$0x3] %vm20, %v746
  %750 = vrot.lane.b32.xlu0 %v708, 96
  %v751 = vpop.permute.xlu0 %750
  %753 = vst.msk [vmem:[#allocation3] sm:$0x3] %vm20, %v751
  %755 = vrot.lane.b32.xlu0 %v743, 32
  %v756 = vpop.permute.xlu0 %755
  %758 = vst.msk [vmem:[#allocation4] sm:$0x3] %vm20, %v756
  %760 = vrot.lane.b32.xlu0 %v737, 96
  %v761 = vpop.permute.xlu0 %760
  %763 = vst.msk [vmem:[#allocation5] sm:$0x3] %vm20, %v761
  %s764 = scalar_lea.vmem %s4, 6
  %765 = vst.msk [vmem:[%s764] sm:$0x3] %vm20, %v746
  %s766 = scalar_lea.vmem %s5, 8
  %767 = vst.msk [vmem:[%s766] sm:$0x3] %vm20, %v756
  %s768 = scalar_lea.vmem %s0, 8
  %v769 = vld [vmem:[%s768] sm:$0x3]
  %v770 = vld [vmem:[#allocation2] sm:$0x3]
  %v771 = vpack.c.bf16 %v770, %v770
  %v773 = vsel %vm48, %v771, 0
  %775 = vmatprep.subr.bf16.mxu0 0
  %776 = vmatpush1.bf16.msra.mxu0 %v44
  %777 = vmatprep.subr.bf16.mxu0 0
  %778 = vmatpush1.bf16.msra.mxu0 %v45
  %779 = vmatprep.subr.bf16.mxu0 0
  %780 = vmatpush1.bf16.msra.mxu0 0
  %781 = vmatprep.subr.bf16.mxu0 0
  %782 = vmatpush1.bf16.msra.mxu0 0
  %783 = vmatprep.subr.bf16.mxu0 0
  %784 = vmatpush1.bf16.msra.mxu0 0
  %785 = vmatprep.subr.bf16.mxu0 0
  %786 = vmatpush1.bf16.msra.mxu0 0
  %787 = vmatprep.subr.bf16.mxu0 0
  %788 = vmatpush1.bf16.msra.mxu0 0
  %789 = vmatprep.subr.bf16.mxu0 0
  %790 = vmatpush1.bf16.msra.mxu0 0
  %791 = vmatprep.subr.bf16.mxu0 0
  %792 = vmatpush1.bf16.msra.mxu0 0
  %793 = vmatprep.subr.bf16.mxu0 0
  %794 = vmatpush1.bf16.msra.mxu0 0
  %795 = vmatprep.subr.bf16.mxu0 0
  %796 = vmatpush1.bf16.msra.mxu0 0
  %797 = vmatprep.subr.bf16.mxu0 0
  %798 = vmatpush1.bf16.msra.mxu0 0
  %799 = vmatprep.subr.bf16.mxu0 0
  %800 = vmatpush1.bf16.msra.mxu0 0
  %801 = vmatprep.subr.bf16.mxu0 0
  %802 = vmatpush1.bf16.msra.mxu0 0
  %803 = vmatprep.subr.bf16.mxu0 0
  %804 = vmatpush1.bf16.msra.mxu0 0
  %805 = vmatprep.subr.bf16.mxu0 0
  %806 = vmatpush1.bf16.msra.mxu0 0
  %807 = vmatprep.mubr.bf16.mxu0 0
  %808 = vmatmul.mubr.bf16.gmra.mrb[0].mxu0 %v773
  %v809 = vpop.f32.mrb[0].mxu0
  %v810 = vadd.f32 0.0, %v809
  %v811 = vpop.f32.mrb[0].mxu0
  %v812 = vpop.f32.mrb[0].mxu0
  %v813 = vpop.f32.mrb[0].mxu0
  %814 = vdwg.mxu0
  %v815 = vadd.f32 %v769, %v810
  %s816 = scalar_lea.vmem %s1, 6
  %v817 = vld [vmem:[%s816] sm:$0x3]
  %v818 = vld [vmem:[#allocation4] sm:$0x3]
  %v819 = vpack.c.bf16 %v818, %v818
  %v821 = vsel %vm48, %v819, 0
  %823 = vmatprep.subr.bf16.mxu0 0
  %824 = vmatpush1.bf16.msra.mxu0 %v105
  %825 = vmatprep.subr.bf16.mxu0 0
  %826 = vmatpush1.bf16.msra.mxu0 %v106
  %827 = vmatprep.subr.bf16.mxu0 0
  %828 = vmatpush1.bf16.msra.mxu0 0
  %829 = vmatprep.subr.bf16.mxu0 0
  %830 = vmatpush1.bf16.msra.mxu0 0
  %831 = vmatprep.subr.bf16.mxu0 0
  %832 = vmatpush1.bf16.msra.mxu0 0
  %833 = vmatprep.subr.bf16.mxu0 0
  %834 = vmatpush1.bf16.msra.mxu0 0
  %835 = vmatprep.subr.bf16.mxu0 0
  %836 = vmatpush1.bf16.msra.mxu0 0
  %837 = vmatprep.subr.bf16.mxu0 0
  %838 = vmatpush1.bf16.msra.mxu0 0
  %839 = vmatprep.subr.bf16.mxu0 0
  %840 = vmatpush1.bf16.msra.mxu0 0
  %841 = vmatprep.subr.bf16.mxu0 0
  %842 = vmatpush1.bf16.msra.mxu0 0
  %843 = vmatprep.subr.bf16.mxu0 0
  %844 = vmatpush1.bf16.msra.mxu0 0
  %845 = vmatprep.subr.bf16.mxu0 0
  %846 = vmatpush1.bf16.msra.mxu0 0
  %847 = vmatprep.subr.bf16.mxu0 0
  %848 = vmatpush1.bf16.msra.mxu0 0
  %849 = vmatprep.subr.bf16.mxu0 0
  %850 = vmatpush1.bf16.msra.mxu0 0
  %851 = vmatprep.subr.bf16.mxu0 0
  %852 = vmatpush1.bf16.msra.mxu0 0
  %853 = vmatprep.subr.bf16.mxu0 0
  %854 = vmatpush1.bf16.msra.mxu0 0
  %855 = vmatprep.mubr.bf16.mxu0 0
  %856 = vmatmul.mubr.bf16.gmra.mrb[0].mxu0 %v821
  %v857 = vpop.f32.mrb[0].mxu0
  %v858 = vadd.f32 0.0, %v857
  %v859 = vpop.f32.mrb[0].mxu0
  %v860 = vpop.f32.mrb[0].mxu0
  %v861 = vpop.f32.mrb[0].mxu0
  %862 = vdwg.mxu0
  %v863 = vadd.f32 %v817, %v858
  %v864 = vld [vmem:[#allocation3] sm:$0x3]
  %v865 = vxor.u32 %v815, 2147483648
  %v866 = vmul.f32 %v865, 1.442695
  %v867 = vpow.pop %v866
  %v868 = vadd.f32 %v867, 1.0
  %v869 = vrcp.pop %v868
  %v870 = vmul.f32 1.0, %v869
  %v871 = vtanh.pop %v815
  %873 = vrot.lane.b32.xlu0 %v864, 32
  %v874 = vpop.permute.xlu0 %873
  %v876 = vmul.f32 %v870, %v874
  %878 = vrot.lane.b32.xlu0 %v871, 64
  %v879 = vpop.permute.xlu0 %878
  %v881 = vmul.f32 %v870, %v879
  %883 = vrot.lane.b32.xlu0 %v881, 32
  %v884 = vpop.permute.xlu0 %883
  %v886 = vadd.f32 %v876, %v884
  %v887 = vtanh.pop %v886
  %889 = vrot.lane.b32.xlu0 %v887, 64
  %v890 = vpop.permute.xlu0 %889
  %v892 = vmul.f32 %v870, %v890
  %v893 = vld [vmem:[#allocation5] sm:$0x3]
  %v894 = vxor.u32 %v863, 2147483648
  %v895 = vmul.f32 %v894, 1.442695
  %v896 = vpow.pop %v895
  %v897 = vadd.f32 %v896, 1.0
  %v898 = vrcp.pop %v897
  %v899 = vmul.f32 1.0, %v898
  %v900 = vtanh.pop %v863
  %902 = vrot.lane.b32.xlu0 %v893, 32
  %v903 = vpop.permute.xlu0 %902
  %v905 = vmul.f32 %v899, %v903
  %907 = vrot.lane.b32.xlu0 %v900, 64
  %v908 = vpop.permute.xlu0 %907
  %v910 = vmul.f32 %v899, %v908
  %912 = vrot.lane.b32.xlu0 %v910, 32
  %v913 = vpop.permute.xlu0 %912
  %v915 = vadd.f32 %v905, %v913
  %v916 = vtanh.pop %v915
  %918 = vrot.lane.b32.xlu0 %v916, 64
  %v919 = vpop.permute.xlu0 %918
  %v921 = vmul.f32 %v899, %v919
  %923 = vrot.lane.b32.xlu0 %v892, 32
  %v924 = vpop.permute.xlu0 %923
  %926 = vst.msk [vmem:[#allocation2] sm:$0x3] %vm20, %v924
  %928 = vrot.lane.b32.xlu0 %v886, 96
  %v929 = vpop.permute.xlu0 %928
  %931 = vst.msk [vmem:[#allocation3] sm:$0x3] %vm20, %v929
  %933 = vrot.lane.b32.xlu0 %v921, 32
  %v934 = vpop.permute.xlu0 %933
  %936 = vst.msk [vmem:[#allocation4] sm:$0x3] %vm20, %v934
  %938 = vrot.lane.b32.xlu0 %v915, 96
  %v939 = vpop.permute.xlu0 %938
  %941 = vst.msk [vmem:[#allocation5] sm:$0x3] %vm20, %v939
  %s942 = scalar_lea.vmem %s4, 8
  %943 = vst.msk [vmem:[%s942] sm:$0x3] %vm20, %v924
  %s944 = scalar_lea.vmem %s5, 6
  %945 = vst.msk [vmem:[%s944] sm:$0x3] %vm20, %v934
  %s946 = scalar_lea.vmem %s0, 10
  %v947 = vld [vmem:[%s946] sm:$0x3]
  %v948 = vld [vmem:[#allocation2] sm:$0x3]
  %v949 = vpack.c.bf16 %v948, %v948
  %v951 = vsel %vm48, %v949, 0
  %953 = vmatprep.subr.bf16.mxu0 0
  %954 = vmatpush1.bf16.msra.mxu0 %v44
  %955 = vmatprep.subr.bf16.mxu0 0
  %956 = vmatpush1.bf16.msra.mxu0 %v45
  %957 = vmatprep.subr.bf16.mxu0 0
  %958 = vmatpush1.bf16.msra.mxu0 0
  %959 = vmatprep.subr.bf16.mxu0 0
  %960 = vmatpush1.bf16.msra.mxu0 0
  %961 = vmatprep.subr.bf16.mxu0 0
  %962 = vmatpush1.bf16.msra.mxu0 0
  %963 = vmatprep.subr.bf16.mxu0 0
  %964 = vmatpush1.bf16.msra.mxu0 0
  %965 = vmatprep.subr.bf16.mxu0 0
  %966 = vmatpush1.bf16.msra.mxu0 0
  %967 = vmatprep.subr.bf16.mxu0 0
  %968 = vmatpush1.bf16.msra.mxu0 0
  %969 = vmatprep.subr.bf16.mxu0 0
  %970 = vmatpush1.bf16.msra.mxu0 0
  %971 = vmatprep.subr.bf16.mxu0 0
  %972 = vmatpush1.bf16.msra.mxu0 0
  %973 = vmatprep.subr.bf16.mxu0 0
  %974 = vmatpush1.bf16.msra.mxu0 0
  %975 = vmatprep.subr.bf16.mxu0 0
  %976 = vmatpush1.bf16.msra.mxu0 0
  %977 = vmatprep.subr.bf16.mxu0 0
  %978 = vmatpush1.bf16.msra.mxu0 0
  %979 = vmatprep.subr.bf16.mxu0 0
  %980 = vmatpush1.bf16.msra.mxu0 0
  %981 = vmatprep.subr.bf16.mxu0 0
  %982 = vmatpush1.bf16.msra.mxu0 0
  %983 = vmatprep.subr.bf16.mxu0 0
  %984 = vmatpush1.bf16.msra.mxu0 0
  %985 = vmatprep.mubr.bf16.mxu0 0
  %986 = vmatmul.mubr.bf16.gmra.mrb[0].mxu0 %v951
  %v987 = vpop.f32.mrb[0].mxu0
  %v988 = vadd.f32 0.0, %v987
  %v989 = vpop.f32.mrb[0].mxu0
  %v990 = vpop.f32.mrb[0].mxu0
  %v991 = vpop.f32.mrb[0].mxu0
  %992 = vdwg.mxu0
  %v993 = vadd.f32 %v947, %v988
  %s994 = scalar_lea.vmem %s1, 4
  %v995 = vld [vmem:[%s994] sm:$0x3]
  %v996 = vld [vmem:[#allocation4] sm:$0x3]
  %v997 = vpack.c.bf16 %v996, %v996
  %v999 = vsel %vm48, %v997, 0
  %1001 = vmatprep.subr.bf16.mxu0 0
  %1002 = vmatpush1.bf16.msra.mxu0 %v105
  %1003 = vmatprep.subr.bf16.mxu0 0
  %1004 = vmatpush1.bf16.msra.mxu0 %v106
  %1005 = vmatprep.subr.bf16.mxu0 0
  %1006 = vmatpush1.bf16.msra.mxu0 0
  %1007 = vmatprep.subr.bf16.mxu0 0
  %1008 = vmatpush1.bf16.msra.mxu0 0
  %1009 = vmatprep.subr.bf16.mxu0 0
  %1010 = vmatpush1.bf16.msra.mxu0 0
  %1011 = vmatprep.subr.bf16.mxu0 0
  %1012 = vmatpush1.bf16.msra.mxu0 0
  %1013 = vmatprep.subr.bf16.mxu0 0
  %1014 = vmatpush1.bf16.msra.mxu0 0
  %1015 = vmatprep.subr.bf16.mxu0 0
  %1016 = vmatpush1.bf16.msra.mxu0 0
  %1017 = vmatprep.subr.bf16.mxu0 0
  %1018 = vmatpush1.bf16.msra.mxu0 0
  %1019 = vmatprep.subr.bf16.mxu0 0
  %1020 = vmatpush1.bf16.msra.mxu0 0
  %1021 = vmatprep.subr.bf16.mxu0 0
  %1022 = vmatpush1.bf16.msra.mxu0 0
  %1023 = vmatprep.subr.bf16.mxu0 0
  %1024 = vmatpush1.bf16.msra.mxu0 0
  %1025 = vmatprep.subr.bf16.mxu0 0
  %1026 = vmatpush1.bf16.msra.mxu0 0
  %1027 = vmatprep.subr.bf16.mxu0 0
  %1028 = vmatpush1.bf16.msra.mxu0 0
  %1029 = vmatprep.subr.bf16.mxu0 0
  %1030 = vmatpush1.bf16.msra.mxu0 0
  %1031 = vmatprep.subr.bf16.mxu0 0
  %1032 = vmatpush1.bf16.msra.mxu0 0
  %1033 = vmatprep.mubr.bf16.mxu0 0
  %1034 = vmatmul.mubr.bf16.gmra.mrb[0].mxu0 %v999
  %v1035 = vpop.f32.mrb[0].mxu0
  %v1036 = vadd.f32 0.0, %v1035
  %v1037 = vpop.f32.mrb[0].mxu0
  %v1038 = vpop.f32.mrb[0].mxu0
  %v1039 = vpop.f32.mrb[0].mxu0
  %1040 = vdwg.mxu0
  %v1041 = vadd.f32 %v995, %v1036
  %v1042 = vld [vmem:[#allocation3] sm:$0x3]
  %v1043 = vxor.u32 %v993, 2147483648
  %v1044 = vmul.f32 %v1043, 1.442695
  %v1045 = vpow.pop %v1044
  %v1046 = vadd.f32 %v1045, 1.0
  %v1047 = vrcp.pop %v1046
  %v1048 = vmul.f32 1.0, %v1047
  %v1049 = vtanh.pop %v993
  %1051 = vrot.lane.b32.xlu0 %v1042, 32
  %v1052 = vpop.permute.xlu0 %1051
  %v1054 = vmul.f32 %v1048, %v1052
  %1056 = vrot.lane.b32.xlu0 %v1049, 64
  %v1057 = vpop.permute.xlu0 %1056
  %v1059 = vmul.f32 %v1048, %v1057
  %1061 = vrot.lane.b32.xlu0 %v1059, 32
  %v1062 = vpop.permute.xlu0 %1061
  %v1064 = vadd.f32 %v1054, %v1062
  %v1065 = vtanh.pop %v1064
  %1067 = vrot.lane.b32.xlu0 %v1065, 64
  %v1068 = vpop.permute.xlu0 %1067
  %v1070 = vmul.f32 %v1048, %v1068
  %v1071 = vld [vmem:[#allocation5] sm:$0x3]
  %v1072 = vxor.u32 %v1041, 2147483648
  %v1073 = vmul.f32 %v1072, 1.442695
  %v1074 = vpow.pop %v1073
  %v1075 = vadd.f32 %v1074, 1.0
  %v1076 = vrcp.pop %v1075
  %v1077 = vmul.f32 1.0, %v1076
  %v1078 = vtanh.pop %v1041
  %1080 = vrot.lane.b32.xlu0 %v1071, 32
  %v1081 = vpop.permute.xlu0 %1080
  %v1083 = vmul.f32 %v1077, %v1081
  %1085 = vrot.lane.b32.xlu0 %v1078, 64
  %v1086 = vpop.permute.xlu0 %1085
  %v1088 = vmul.f32 %v1077, %v1086
  %1090 = vrot.lane.b32.xlu0 %v1088, 32
  %v1091 = vpop.permute.xlu0 %1090
  %v1093 = vadd.f32 %v1083, %v1091
  %v1094 = vtanh.pop %v1093
  %1096 = vrot.lane.b32.xlu0 %v1094, 64
  %v1097 = vpop.permute.xlu0 %1096
  %v1099 = vmul.f32 %v1077, %v1097
  %1101 = vrot.lane.b32.xlu0 %v1070, 32
  %v1102 = vpop.permute.xlu0 %1101
  %1104 = vst.msk [vmem:[#allocation2] sm:$0x3] %vm20, %v1102
  %1106 = vrot.lane.b32.xlu0 %v1064, 96
  %v1107 = vpop.permute.xlu0 %1106
  %1109 = vst.msk [vmem:[#allocation3] sm:$0x3] %vm20, %v1107
  %1111 = vrot.lane.b32.xlu0 %v1099, 32
  %v1112 = vpop.permute.xlu0 %1111
  %1114 = vst.msk [vmem:[#allocation4] sm:$0x3] %vm20, %v1112
  %1116 = vrot.lane.b32.xlu0 %v1093, 96
  %v1117 = vpop.permute.xlu0 %1116
  %1119 = vst.msk [vmem:[#allocation5] sm:$0x3] %vm20, %v1117
  %s1120 = scalar_lea.vmem %s4, 10
  %1121 = vst.msk [vmem:[%s1120] sm:$0x3] %vm20, %v1102
  %s1122 = scalar_lea.vmem %s5, 4
  %1123 = vst.msk [vmem:[%s1122] sm:$0x3] %vm20, %v1112
  %s1124 = scalar_lea.vmem %s0, 12
  %v1125 = vld [vmem:[%s1124] sm:$0x3]
  %v1126 = vld [vmem:[#allocation2] sm:$0x3]
  %v1127 = vpack.c.bf16 %v1126, %v1126
  %v1129 = vsel %vm48, %v1127, 0
  %1131 = vmatprep.subr.bf16.mxu0 0
  %1132 = vmatpush1.bf16.msra.mxu0 %v44
  %1133 = vmatprep.subr.bf16.mxu0 0
  %1134 = vmatpush1.bf16.msra.mxu0 %v45
  %1135 = vmatprep.subr.bf16.mxu0 0
  %1136 = vmatpush1.bf16.msra.mxu0 0
  %1137 = vmatprep.subr.bf16.mxu0 0
  %1138 = vmatpush1.bf16.msra.mxu0 0
  %1139 = vmatprep.subr.bf16.mxu0 0
  %1140 = vmatpush1.bf16.msra.mxu0 0
  %1141 = vmatprep.subr.bf16.mxu0 0
  %1142 = vmatpush1.bf16.msra.mxu0 0
  %1143 = vmatprep.subr.bf16.mxu0 0
  %1144 = vmatpush1.bf16.msra.mxu0 0
  %1145 = vmatprep.subr.bf16.mxu0 0
  %1146 = vmatpush1.bf16.msra.mxu0 0
  %1147 = vmatprep.subr.bf16.mxu0 0
  %1148 = vmatpush1.bf16.msra.mxu0 0
  %1149 = vmatprep.subr.bf16.mxu0 0
  %1150 = vmatpush1.bf16.msra.mxu0 0
  %1151 = vmatprep.subr.bf16.mxu0 0
  %1152 = vmatpush1.bf16.msra.mxu0 0
  %1153 = vmatprep.subr.bf16.mxu0 0
  %1154 = vmatpush1.bf16.msra.mxu0 0
  %1155 = vmatprep.subr.bf16.mxu0 0
  %1156 = vmatpush1.bf16.msra.mxu0 0
  %1157 = vmatprep.subr.bf16.mxu0 0
  %1158 = vmatpush1.bf16.msra.mxu0 0
  %1159 = vmatprep.subr.bf16.mxu0 0
  %1160 = vmatpush1.bf16.msra.mxu0 0
  %1161 = vmatprep.subr.bf16.mxu0 0
  %1162 = vmatpush1.bf16.msra.mxu0 0
  %1163 = vmatprep.mubr.bf16.mxu0 0
  %1164 = vmatmul.mubr.bf16.gmra.mrb[0].mxu0 %v1129
  %v1165 = vpop.f32.mrb[0].mxu0
  %v1166 = vadd.f32 0.0, %v1165
  %v1167 = vpop.f32.mrb[0].mxu0
  %v1168 = vpop.f32.mrb[0].mxu0
  %v1169 = vpop.f32.mrb[0].mxu0
  %1170 = vdwg.mxu0
  %v1171 = vadd.f32 %v1125, %v1166
  %s1172 = scalar_lea.vmem %s1, 2
  %v1173 = vld [vmem:[%s1172] sm:$0x3]
  %v1174 = vld [vmem:[#allocation4] sm:$0x3]
  %v1175 = vpack.c.bf16 %v1174, %v1174
  %v1177 = vsel %vm48, %v1175, 0
  %1179 = vmatprep.subr.bf16.mxu0 0
  %1180 = vmatpush1.bf16.msra.mxu0 %v105
  %1181 = vmatprep.subr.bf16.mxu0 0
  %1182 = vmatpush1.bf16.msra.mxu0 %v106
  %1183 = vmatprep.subr.bf16.mxu0 0
  %1184 = vmatpush1.bf16.msra.mxu0 0
  %1185 = vmatprep.subr.bf16.mxu0 0
  %1186 = vmatpush1.bf16.msra.mxu0 0
  %1187 = vmatprep.subr.bf16.mxu0 0
  %1188 = vmatpush1.bf16.msra.mxu0 0
  %1189 = vmatprep.subr.bf16.mxu0 0
  %1190 = vmatpush1.bf16.msra.mxu0 0
  %1191 = vmatprep.subr.bf16.mxu0 0
  %1192 = vmatpush1.bf16.msra.mxu0 0
  %1193 = vmatprep.subr.bf16.mxu0 0
  %1194 = vmatpush1.bf16.msra.mxu0 0
  %1195 = vmatprep.subr.bf16.mxu0 0
  %1196 = vmatpush1.bf16.msra.mxu0 0
  %1197 = vmatprep.subr.bf16.mxu0 0
  %1198 = vmatpush1.bf16.msra.mxu0 0
  %1199 = vmatprep.subr.bf16.mxu0 0
  %1200 = vmatpush1.bf16.msra.mxu0 0
  %1201 = vmatprep.subr.bf16.mxu0 0
  %1202 = vmatpush1.bf16.msra.mxu0 0
  %1203 = vmatprep.subr.bf16.mxu0 0
  %1204 = vmatpush1.bf16.msra.mxu0 0
  %1205 = vmatprep.subr.bf16.mxu0 0
  %1206 = vmatpush1.bf16.msra.mxu0 0
  %1207 = vmatprep.subr.bf16.mxu0 0
  %1208 = vmatpush1.bf16.msra.mxu0 0
  %1209 = vmatprep.subr.bf16.mxu0 0
  %1210 = vmatpush1.bf16.msra.mxu0 0
  %1211 = vmatprep.mubr.bf16.mxu0 0
  %1212 = vmatmul.mubr.bf16.gmra.mrb[0].mxu0 %v1177
  %v1213 = vpop.f32.mrb[0].mxu0
  %v1214 = vadd.f32 0.0, %v1213
  %v1215 = vpop.f32.mrb[0].mxu0
  %v1216 = vpop.f32.mrb[0].mxu0
  %v1217 = vpop.f32.mrb[0].mxu0
  %1218 = vdwg.mxu0
  %v1219 = vadd.f32 %v1173, %v1214
  %v1220 = vld [vmem:[#allocation3] sm:$0x3]
  %v1221 = vxor.u32 %v1171, 2147483648
  %v1222 = vmul.f32 %v1221, 1.442695
  %v1223 = vpow.pop %v1222
  %v1224 = vadd.f32 %v1223, 1.0
  %v1225 = vrcp.pop %v1224
  %v1226 = vmul.f32 1.0, %v1225
  %v1227 = vtanh.pop %v1171
  %1229 = vrot.lane.b32.xlu0 %v1220, 32
  %v1230 = vpop.permute.xlu0 %1229
  %v1232 = vmul.f32 %v1226, %v1230
  %1234 = vrot.lane.b32.xlu0 %v1227, 64
  %v1235 = vpop.permute.xlu0 %1234
  %v1237 = vmul.f32 %v1226, %v1235
  %1239 = vrot.lane.b32.xlu0 %v1237, 32
  %v1240 = vpop.permute.xlu0 %1239
  %v1242 = vadd.f32 %v1232, %v1240
  %v1243 = vtanh.pop %v1242
  %1245 = vrot.lane.b32.xlu0 %v1243, 64
  %v1246 = vpop.permute.xlu0 %1245
  %v1248 = vmul.f32 %v1226, %v1246
  %v1249 = vld [vmem:[#allocation5] sm:$0x3]
  %v1250 = vxor.u32 %v1219, 2147483648
  %v1251 = vmul.f32 %v1250, 1.442695
  %v1252 = vpow.pop %v1251
  %v1253 = vadd.f32 %v1252, 1.0
  %v1254 = vrcp.pop %v1253
  %v1255 = vmul.f32 1.0, %v1254
  %v1256 = vtanh.pop %v1219
  %1258 = vrot.lane.b32.xlu0 %v1249, 32
  %v1259 = vpop.permute.xlu0 %1258
  %v1261 = vmul.f32 %v1255, %v1259
  %1263 = vrot.lane.b32.xlu0 %v1256, 64
  %v1264 = vpop.permute.xlu0 %1263
  %v1266 = vmul.f32 %v1255, %v1264
  %1268 = vrot.lane.b32.xlu0 %v1266, 32
  %v1269 = vpop.permute.xlu0 %1268
  %v1271 = vadd.f32 %v1261, %v1269
  %v1272 = vtanh.pop %v1271
  %1274 = vrot.lane.b32.xlu0 %v1272, 64
  %v1275 = vpop.permute.xlu0 %1274
  %v1277 = vmul.f32 %v1255, %v1275
  %1279 = vrot.lane.b32.xlu0 %v1248, 32
  %v1280 = vpop.permute.xlu0 %1279
  %1282 = vst.msk [vmem:[#allocation2] sm:$0x3] %vm20, %v1280
  %1284 = vrot.lane.b32.xlu0 %v1242, 96
  %v1285 = vpop.permute.xlu0 %1284
  %1287 = vst.msk [vmem:[#allocation3] sm:$0x3] %vm20, %v1285
  %1289 = vrot.lane.b32.xlu0 %v1277, 32
  %v1290 = vpop.permute.xlu0 %1289
  %1292 = vst.msk [vmem:[#allocation4] sm:$0x3] %vm20, %v1290
  %1294 = vrot.lane.b32.xlu0 %v1271, 96
  %v1295 = vpop.permute.xlu0 %1294
  %1297 = vst.msk [vmem:[#allocation5] sm:$0x3] %vm20, %v1295
  %s1298 = scalar_lea.vmem %s4, 12
  %1299 = vst.msk [vmem:[%s1298] sm:$0x3] %vm20, %v1280
  %s1300 = scalar_lea.vmem %s5, 2
  %1301 = vst.msk [vmem:[%s1300] sm:$0x3] %vm20, %v1290
  %s1302 = scalar_lea.vmem %s0, 14
  %v1303 = vld [vmem:[%s1302] sm:$0x3]
  %v1304 = vld [vmem:[#allocation2] sm:$0x3]
  %v1305 = vpack.c.bf16 %v1304, %v1304
  %v1307 = vsel %vm48, %v1305, 0
  %1309 = vmatprep.subr.bf16.mxu0 0
  %1310 = vmatpush1.bf16.msra.mxu0 %v44
  %1311 = vmatprep.subr.bf16.mxu0 0
  %1312 = vmatpush1.bf16.msra.mxu0 %v45
  %1313 = vmatprep.subr.bf16.mxu0 0
  %1314 = vmatpush1.bf16.msra.mxu0 0
  %1315 = vmatprep.subr.bf16.mxu0 0
  %1316 = vmatpush1.bf16.msra.mxu0 0
  %1317 = vmatprep.subr.bf16.mxu0 0
  %1318 = vmatpush1.bf16.msra.mxu0 0
  %1319 = vmatprep.subr.bf16.mxu0 0
  %1320 = vmatpush1.bf16.msra.mxu0 0
  %1321 = vmatprep.subr.bf16.mxu0 0
  %1322 = vmatpush1.bf16.msra.mxu0 0
  %1323 = vmatprep.subr.bf16.mxu0 0
  %1324 = vmatpush1.bf16.msra.mxu0 0
  %1325 = vmatprep.subr.bf16.mxu0 0
  %1326 = vmatpush1.bf16.msra.mxu0 0
  %1327 = vmatprep.subr.bf16.mxu0 0
  %1328 = vmatpush1.bf16.msra.mxu0 0
  %1329 = vmatprep.subr.bf16.mxu0 0
  %1330 = vmatpush1.bf16.msra.mxu0 0
  %1331 = vmatprep.subr.bf16.mxu0 0
  %1332 = vmatpush1.bf16.msra.mxu0 0
  %1333 = vmatprep.subr.bf16.mxu0 0
  %1334 = vmatpush1.bf16.msra.mxu0 0
  %1335 = vmatprep.subr.bf16.mxu0 0
  %1336 = vmatpush1.bf16.msra.mxu0 0
  %1337 = vmatprep.subr.bf16.mxu0 0
  %1338 = vmatpush1.bf16.msra.mxu0 0
  %1339 = vmatprep.subr.bf16.mxu0 0
  %1340 = vmatpush1.bf16.msra.mxu0 0
  %1341 = vmatprep.mubr.bf16.mxu0 0
  %1342 = vmatmul.mubr.bf16.gmra.mrb[0].mxu0 %v1307
  %v1343 = vpop.f32.mrb[0].mxu0
  %v1344 = vadd.f32 0.0, %v1343
  %v1345 = vpop.f32.mrb[0].mxu0
  %v1346 = vpop.f32.mrb[0].mxu0
  %v1347 = vpop.f32.mrb[0].mxu0
  %1348 = vdwg.mxu0
  %v1349 = vadd.f32 %v1303, %v1344
  %v1350 = vld [vmem:[%s1] sm:$0x3]
  %v1351 = vld [vmem:[#allocation4] sm:$0x3]
  %v1352 = vpack.c.bf16 %v1351, %v1351
  %v1354 = vsel %vm48, %v1352, 0
  %1356 = vmatprep.subr.bf16.mxu0 0
  %1357 = vmatpush1.bf16.msra.mxu0 %v105
  %1358 = vmatprep.subr.bf16.mxu0 0
  %1359 = vmatpush1.bf16.msra.mxu0 %v106
  %1360 = vmatprep.subr.bf16.mxu0 0
  %1361 = vmatpush1.bf16.msra.mxu0 0
  %1362 = vmatprep.subr.bf16.mxu0 0
  %1363 = vmatpush1.bf16.msra.mxu0 0
  %1364 = vmatprep.subr.bf16.mxu0 0
  %1365 = vmatpush1.bf16.msra.mxu0 0
  %1366 = vmatprep.subr.bf16.mxu0 0
  %1367 = vmatpush1.bf16.msra.mxu0 0
  %1368 = vmatprep.subr.bf16.mxu0 0
  %1369 = vmatpush1.bf16.msra.mxu0 0
  %1370 = vmatprep.subr.bf16.mxu0 0
  %1371 = vmatpush1.bf16.msra.mxu0 0
  %1372 = vmatprep.subr.bf16.mxu0 0
  %1373 = vmatpush1.bf16.msra.mxu0 0
  %1374 = vmatprep.subr.bf16.mxu0 0
  %1375 = vmatpush1.bf16.msra.mxu0 0
  %1376 = vmatprep.subr.bf16.mxu0 0
  %1377 = vmatpush1.bf16.msra.mxu0 0
  %1378 = vmatprep.subr.bf16.mxu0 0
  %1379 = vmatpush1.bf16.msra.mxu0 0
  %1380 = vmatprep.subr.bf16.mxu0 0
  %1381 = vmatpush1.bf16.msra.mxu0 0
  %1382 = vmatprep.subr.bf16.mxu0 0
  %1383 = vmatpush1.bf16.msra.mxu0 0
  %1384 = vmatprep.subr.bf16.mxu0 0
  %1385 = vmatpush1.bf16.msra.mxu0 0
  %1386 = vmatprep.subr.bf16.mxu0 0
  %1387 = vmatpush1.bf16.msra.mxu0 0
  %1388 = vmatprep.mubr.bf16.mxu0 0
  %1389 = vmatmul.mubr.bf16.gmra.mrb[0].mxu0 %v1354
  %v1390 = vpop.f32.mrb[0].mxu0
  %v1391 = vadd.f32 0.0, %v1390
  %v1392 = vpop.f32.mrb[0].mxu0
  %v1393 = vpop.f32.mrb[0].mxu0
  %v1394 = vpop.f32.mrb[0].mxu0
  %1395 = vdwg.mxu0
  %v1396 = vadd.f32 %v1350, %v1391
  %v1397 = vld [vmem:[#allocation3] sm:$0x3]
  %v1398 = vxor.u32 %v1349, 2147483648
  %v1399 = vmul.f32 %v1398, 1.442695
  %v1400 = vpow.pop %v1399
  %v1401 = vadd.f32 %v1400, 1.0
  %v1402 = vrcp.pop %v1401
  %v1403 = vmul.f32 1.0, %v1402
  %v1404 = vtanh.pop %v1349
  %1406 = vrot.lane.b32.xlu0 %v1397, 32
  %v1407 = vpop.permute.xlu0 %1406
  %v1409 = vmul.f32 %v1403, %v1407
  %1411 = vrot.lane.b32.xlu0 %v1404, 64
  %v1412 = vpop.permute.xlu0 %1411
  %v1414 = vmul.f32 %v1403, %v1412
  %1416 = vrot.lane.b32.xlu0 %v1414, 32
  %v1417 = vpop.permute.xlu0 %1416
  %v1419 = vadd.f32 %v1409, %v1417
  %v1420 = vtanh.pop %v1419
  %1422 = vrot.lane.b32.xlu0 %v1420, 64
  %v1423 = vpop.permute.xlu0 %1422
  %v1425 = vmul.f32 %v1403, %v1423
  %v1426 = vld [vmem:[#allocation5] sm:$0x3]
  %v1427 = vxor.u32 %v1396, 2147483648
  %v1428 = vmul.f32 %v1427, 1.442695
  %v1429 = vpow.pop %v1428
  %v1430 = vadd.f32 %v1429, 1.0
  %v1431 = vrcp.pop %v1430
  %v1432 = vmul.f32 1.0, %v1431
  %v1433 = vtanh.pop %v1396
  %1435 = vrot.lane.b32.xlu0 %v1426, 32
  %v1436 = vpop.permute.xlu0 %1435
  %v1438 = vmul.f32 %v1432, %v1436
  %1440 = vrot.lane.b32.xlu0 %v1433, 64
  %v1441 = vpop.permute.xlu0 %1440
  %v1443 = vmul.f32 %v1432, %v1441
  %1445 = vrot.lane.b32.xlu0 %v1443, 32
  %v1446 = vpop.permute.xlu0 %1445
  %v1448 = vadd.f32 %v1438, %v1446
  %v1449 = vtanh.pop %v1448
  %1451 = vrot.lane.b32.xlu0 %v1449, 64
  %v1452 = vpop.permute.xlu0 %1451
  %v1454 = vmul.f32 %v1432, %v1452
  %1456 = vrot.lane.b32.xlu0 %v1425, 32
  %v1457 = vpop.permute.xlu0 %1456
  %1459 = vst.msk [vmem:[#allocation2] sm:$0x3] %vm20, %v1457
  %1461 = vrot.lane.b32.xlu0 %v1419, 96
  %v1462 = vpop.permute.xlu0 %1461
  %1464 = vst.msk [vmem:[#allocation3] sm:$0x3] %vm20, %v1462
  %1466 = vrot.lane.b32.xlu0 %v1454, 32
  %v1467 = vpop.permute.xlu0 %1466
  %1469 = vst.msk [vmem:[#allocation4] sm:$0x3] %vm20, %v1467
  %1471 = vrot.lane.b32.xlu0 %v1448, 96
  %v1472 = vpop.permute.xlu0 %1471
  %1474 = vst.msk [vmem:[#allocation5] sm:$0x3] %vm20, %v1472
  %s1475 = scalar_lea.vmem %s4, 14
  %1476 = vst.msk [vmem:[%s1475] sm:$0x3] %vm20, %v1457
  %1477 = vst.msk [vmem:[%s5] sm:$0x3] %vm20, %v1467
  // Predicated region
  $region18: #{time_series_bilstm.2} parent=0 // pred_check
    _
  $region19: #{time_series_bilstm.2} parent=0 // pred_check_branch
    %1479 = sbr.rel (0) target = $region21
  $region20: #{time_series_bilstm.2} parent=0 // pred_region
    _
  $region21: #{time_series_bilstm.2} parent=0 // pred_fallthru
    _
  // Predicated region
  $region22: #{time_series_bilstm.2} parent=0 // pred_check
    _
  $region23: #{time_series_bilstm.2} parent=0 // pred_check_branch
    %1481 = sbr.rel (0) target = $region25
  $region24: #{time_series_bilstm.2} parent=0 // pred_region
    _
  $region25: #{time_series_bilstm.2} parent=0 // pred_fallthru
    _
  // Predicated region
  $region26: #{time_series_bilstm.2} parent=0 // pred_check
    _
  $region27: #{time_series_bilstm.2} parent=0 // pred_check_branch
    %1483 = sbr.rel (0) target = $region29
  $region28: #{time_series_bilstm.2} parent=0 // pred_region
    _
  $region29: #{time_series_bilstm.2} parent=0 // pred_fallthru
    _
  // Predicated region
  $region30: #{time_series_bilstm.2} parent=0 // pred_check
    _
  $region31: #{time_series_bilstm.2} parent=0 // pred_check_branch
    %1485 = sbr.rel (0) target = $region33
  $region32: #{time_series_bilstm.2} parent=0 // pred_region
    _
  $region33: #{time_series_bilstm.2} parent=0 // pred_fallthru
    _

</llo_original>
